<compile_context>
chip_gen: v6e
topology: v6e:2x2x1
jax: 0.10.0
libtpu: 0.0.40
codegen_flags: <defaults>
</compile_context>

<pallas_src>
import jax
import jax.numpy as jnp
from jax.experimental import pallas as pl
from jax.experimental.pallas import tpu as pltpu

SEQ = 8
BATCH = 4
INPUT_DIM = 16
HIDDEN = 32
OUTPUT_DIM = 3
NUM_LAYERS = 2


def _lstm_kernel(x_ref,              # (SEQ*Bp, D)   time-flattened, batch-padded
                 wih0_ref,           # (D, 4H)
                 whh0_ref,           # (H, 4H)
                 b0_ref,             # (1, 4H)
                 w1_ref,             # (2H, 4H)      fused [Wih1; Whh1]
                 b1_ref,             # (1, 4H)
                 wlin_ref,           # (H, Op)       lane-padded final Linear
                 blin_ref,           # (1, Op)
                 logits_ref,         # (Bp, Op)
                 h_ref,              # (NUM_LAYERS, Bp, H)
                 c_ref):             # (NUM_LAYERS, Bp, H)
    Bp = h_ref.shape[1]
    H = h_ref.shape[2]
    seq = x_ref.shape[0] // Bp

    # --- hoisted layer-0 input projection (no sequential dependency) -------
    # One (seq*Bp, D) x (D, 4H) MXU matmul for all timesteps.
    gx0 = (jnp.dot(x_ref[...], wih0_ref[...],
                   preferred_element_type=jnp.float32)
           + b0_ref[...])                                   # (seq*Bp, 4H)

    whh0 = whh0_ref[...]
    w1 = w1_ref[...]
    b1 = b1_ref[...]

    def act(gates):
        i = jax.nn.sigmoid(gates[:, 0 * H:1 * H])
        f = jax.nn.sigmoid(gates[:, 1 * H:2 * H])
        g = jnp.tanh(gates[:, 2 * H:3 * H])
        o = jax.nn.sigmoid(gates[:, 3 * H:4 * H])
        return i, f, g, o

    # Zero initial state (hidden=None in the PyTorch forward).
    h0 = jnp.zeros((Bp, H), jnp.float32)
    c0 = jnp.zeros((Bp, H), jnp.float32)
    h1 = jnp.zeros((Bp, H), jnp.float32)
    c1 = jnp.zeros((Bp, H), jnp.float32)

    # --- fully-unrolled time recurrence; h/c stay in vregs ------------------
    for t in range(seq):
        # layer 0: only the recurrent matmul remains per step
        gates0 = gx0[t * Bp:(t + 1) * Bp, :] + jnp.dot(
            h0, whh0, preferred_element_type=jnp.float32)
        i, f, g, o = act(gates0)
        c0 = f * c0 + i * g
        h0 = o * jnp.tanh(c0)

        # layer 1: fused [x_t; h] @ [Wih; Whh]  ->  one K=2H matmul
        gates1 = (jnp.dot(jnp.concatenate([h0, h1], axis=-1), w1,
                          preferred_element_type=jnp.float32)
                  + b1)
        i, f, g, o = act(gates1)
        c1 = f * c1 + i * g
        h1 = o * jnp.tanh(c1)

    # --- single writeback of outputs ---------------------------------------
    logits_ref[...] = (jnp.dot(h1, wlin_ref[...],
                               preferred_element_type=jnp.float32)
                       + blin_ref[...])
    h_ref[0] = h0
    h_ref[1] = h1
    c_ref[0] = c0
    c_ref[1] = c1


def lstm_forward(x, params):
    """x: (SEQ, BATCH, INPUT_DIM) f32. Returns (logits, (h_n, c_n))."""
    seq, B, D = x.shape
    H, O = HIDDEN, OUTPUT_DIM
    Bp = max(8, ((B + 7) // 8) * 8)        # pad batch to full sublane group
    Op = ((O + 127) // 128) * 128          # pad logits to full lane group

    # ---- parameter prep (plain-JAX glue) ----------------------------------
    wih0 = params["w_ih_l0"].T                                   # (D, 4H)
    whh0 = params["w_hh_l0"].T                                   # (H, 4H)
    b0 = (params["b_ih_l0"] + params["b_hh_l0"])[None, :]        # (1, 4H)
    # layer-1: stack input/recurrent weights so the cell does one dot
    w1 = jnp.concatenate([params["w_ih_l1"].T,
                          params["w_hh_l1"].T], axis=0)          # (2H, 4H)
    b1 = (params["b_ih_l1"] + params["b_hh_l1"])[None, :]        # (1, 4H)
    # final Linear, lane-padded to 128 for an unmasked store
    wlin = jnp.zeros((H, Op), jnp.float32).at[:, :O].set(params["w_lin"].T)
    blin = jnp.zeros((1, Op), jnp.float32).at[:, :O].set(params["b_lin"])

    # ---- input prep: pad batch and flatten time into rows ------------------
    xp = jnp.zeros((seq, Bp, D), jnp.float32).at[:, :B, :].set(x)
    x2d = xp.reshape(seq * Bp, D)

    full = lambda shape: pl.BlockSpec(shape, lambda t: (0,) * len(shape))

    logits_p, h_p, c_p = pl.pallas_call(
        _lstm_kernel,
        out_shape=(
            jax.ShapeDtypeStruct((Bp, Op), jnp.float32),
            jax.ShapeDtypeStruct((NUM_LAYERS, Bp, H), jnp.float32),
            jax.ShapeDtypeStruct((NUM_LAYERS, Bp, H), jnp.float32),
        ),
        grid_spec=pltpu.PrefetchScalarGridSpec(
            num_scalar_prefetch=0,
            grid=(1,),                       # single invocation; recurrence in-kernel
            in_specs=[
                full(x2d.shape),             # whole x in one DMA
                full(wih0.shape), full(whh0.shape), full(b0.shape),
                full(w1.shape), full(b1.shape),
                full(wlin.shape), full(blin.shape),
            ],
            out_specs=[
                full((Bp, Op)),
                full((NUM_LAYERS, Bp, H)),
                full((NUM_LAYERS, Bp, H)),
            ],
        ),
        compiler_params=pltpu.CompilerParams(
            dimension_semantics=("arbitrary",)),
    )(x2d, wih0, whh0, b0, w1, b1, wlin, blin)

    # strip padding
    logits = logits_p[:B, :O]
    h_n = h_p[:, :B, :]
    c_n = c_p[:, :B, :]
    return logits, (h_n, c_n)


def lstm_reference(x, params):
    """Pure-JAX reference matching torch.nn.LSTM semantics."""
    def cell(x_t, h, c, wih, whh, bih, bhh):
        gates = x_t @ wih.T + bih + h @ whh.T + bhh
        i, f, g, o = jnp.split(gates, 4, axis=-1)
        i, f, o = jax.nn.sigmoid(i), jax.nn.sigmoid(f), jax.nn.sigmoid(o)
        g = jnp.tanh(g)
        c_new = f * c + i * g
        return o * jnp.tanh(c_new), c_new

    B = x.shape[1]
    h = jnp.zeros((NUM_LAYERS, B, HIDDEN), jnp.float32)
    c = jnp.zeros((NUM_LAYERS, B, HIDDEN), jnp.float32)

    def step(carry, x_t):
        h, c = carry
        h0, c0 = cell(x_t, h[0], c[0], params["w_ih_l0"], params["w_hh_l0"],
                      params["b_ih_l0"], params["b_hh_l0"])
        h1, c1 = cell(h0, h[1], c[1], params["w_ih_l1"], params["w_hh_l1"],
                      params["b_ih_l1"], params["b_hh_l1"])
        h = jnp.stack([h0, h1])
        c = jnp.stack([c0, c1])
        return (h, c), h1

    (h, c), outs = jax.lax.scan(step, (h, c), x)
    logits = outs[-1] @ params["w_lin"].T + params["b_lin"]
    return logits, (h, c)


def init_params(key):
    """Deterministic uniform(-1/sqrt(H), 1/sqrt(H)) init (torch default)."""
    H, D, O = HIDDEN, INPUT_DIM, OUTPUT_DIM
    bound = 1.0 / jnp.sqrt(jnp.float32(H))
    shapes = {
        "w_ih_l0": (4 * H, D), "w_hh_l0": (4 * H, H),
        "b_ih_l0": (4 * H,),   "b_hh_l0": (4 * H,),
        "w_ih_l1": (4 * H, H), "w_hh_l1": (4 * H, H),
        "b_ih_l1": (4 * H,),   "b_hh_l1": (4 * H,),
        "w_lin":   (O, H),     "b_lin":   (O,),
    }
    params = {}
    for i, (name, shape) in enumerate(sorted(shapes.items())):
        k = jax.random.fold_in(key, i)
        params[name] = jax.random.uniform(k, shape, jnp.float32, -bound, bound)
    return params


if __name__ == "__main__":
    key = jax.random.PRNGKey(0)
    params = init_params(jax.random.fold_in(key, 100))
    x = jax.random.normal(jax.random.fold_in(key, 200),
                          (SEQ, BATCH, INPUT_DIM), jnp.float32)

    logits, (h_n, c_n) = lstm_forward(x, params)
    jax.block_until_ready((logits, h_n, c_n))

    ref_logits, (ref_h, ref_c) = lstm_reference(x, params)
    assert jnp.allclose(logits, ref_logits, atol=1e-5, rtol=1e-5)
    assert jnp.allclose(h_n, ref_h, atol=1e-5, rtol=1e-5)
    assert jnp.allclose(c_n, ref_c, atol=1e-5, rtol=1e-5)

    print("KERNEL_OK")
</pallas_src>

<mosaic_0001>
module attributes {stable_mosaic.version = 11 : i64} {
  func.func @_lstm_kernel(%arg0: i32, %arg1: memref<64x16xf32, #tpu.memory_space<vmem>>, %arg2: memref<16x128xf32, #tpu.memory_space<vmem>>, %arg3: memref<32x128xf32, #tpu.memory_space<vmem>>, %arg4: memref<1x128xf32, #tpu.memory_space<vmem>>, %arg5: memref<64x128xf32, #tpu.memory_space<vmem>>, %arg6: memref<1x128xf32, #tpu.memory_space<vmem>>, %arg7: memref<32x128xf32, #tpu.memory_space<vmem>>, %arg8: memref<1x128xf32, #tpu.memory_space<vmem>>, %arg9: memref<8x128xf32, #tpu.memory_space<vmem>>, %arg10: memref<2x8x32xf32, #tpu.memory_space<vmem>>, %arg11: memref<2x8x32xf32, #tpu.memory_space<vmem>>) attributes {dimension_semantics = [#tpu.dimension_semantics<arbitrary>], iteration_bounds = array<i64: 1>, scalar_prefetch = 0 : i64, scratch_operands = 0 : i64, tpu.core_type = #tpu.core_type<tc>, window_params = [{pipeline_mode = #tpu.pipeline_mode<synchronous>, transform_indices = @transform_0, window_bounds = array<i64: 64, 16>}, {pipeline_mode = #tpu.pipeline_mode<synchronous>, transform_indices = @transform_1, window_bounds = array<i64: 16, 128>}, {pipeline_mode = #tpu.pipeline_mode<synchronous>, transform_indices = @transform_2, window_bounds = array<i64: 32, 128>}, {pipeline_mode = #tpu.pipeline_mode<synchronous>, transform_indices = @transform_3, window_bounds = array<i64: 1, 128>}, {pipeline_mode = #tpu.pipeline_mode<synchronous>, transform_indices = @transform_4, window_bounds = array<i64: 64, 128>}, {pipeline_mode = #tpu.pipeline_mode<synchronous>, transform_indices = @transform_5, window_bounds = array<i64: 1, 128>}, {pipeline_mode = #tpu.pipeline_mode<synchronous>, transform_indices = @transform_6, window_bounds = array<i64: 32, 128>}, {pipeline_mode = #tpu.pipeline_mode<synchronous>, transform_indices = @transform_7, window_bounds = array<i64: 1, 128>}, {pipeline_mode = #tpu.pipeline_mode<synchronous>, transform_indices = @transform_8, window_bounds = array<i64: 8, 128>}, {pipeline_mode = #tpu.pipeline_mode<synchronous>, transform_indices = @transform_9, window_bounds = array<i64: 2, 8, 32>}, {pipeline_mode = #tpu.pipeline_mode<synchronous>, transform_indices = @transform_10, window_bounds = array<i64: 2, 8, 32>}]} {
    %c0 = arith.constant 0 : index
    %c0_0 = arith.constant 0 : index
    %0 = vector.load %arg1[%c0, %c0_0] : memref<64x16xf32, #tpu.memory_space<vmem>>, vector<64x16xf32>
    %c0_1 = arith.constant 0 : index
    %c0_2 = arith.constant 0 : index
    %1 = vector.load %arg2[%c0_1, %c0_2] : memref<16x128xf32, #tpu.memory_space<vmem>>, vector<16x128xf32>
    %cst = arith.constant dense<0.000000e+00> : vector<64x128xf32>
    %2 = tpu.matmul %0, %1, %cst {dimension_numbers = #tpu.dot_dimension_numbers<[1], [0], [0], [1], [0, 0, 1, 1], [], []>} : vector<64x16xf32>, vector<16x128xf32>, vector<64x128xf32> -> vector<64x128xf32>
    %c0_3 = arith.constant 0 : index
    %c0_4 = arith.constant 0 : index
    %3 = vector.load %arg4[%c0_3, %c0_4] : memref<1x128xf32, #tpu.memory_space<vmem>>, vector<1x128xf32>
    %4 = vector.broadcast %3 : vector<1x128xf32> to vector<64x128xf32>
    %5 = arith.addf %2, %4 : vector<64x128xf32>
    %c0_5 = arith.constant 0 : index
    %c0_6 = arith.constant 0 : index
    %6 = vector.load %arg3[%c0_5, %c0_6] : memref<32x128xf32, #tpu.memory_space<vmem>>, vector<32x128xf32>
    %c0_7 = arith.constant 0 : index
    %c0_8 = arith.constant 0 : index
    %7 = vector.load %arg5[%c0_7, %c0_8] : memref<64x128xf32, #tpu.memory_space<vmem>>, vector<64x128xf32>
    %c0_9 = arith.constant 0 : index
    %c0_10 = arith.constant 0 : index
    %8 = vector.load %arg6[%c0_9, %c0_10] : memref<1x128xf32, #tpu.memory_space<vmem>>, vector<1x128xf32>
    %cst_11 = arith.constant 0.000000e+00 : f32
    %9 = vector.broadcast %cst_11 : f32 to vector<8x32xf32>
    %cst_12 = arith.constant 0.000000e+00 : f32
    %10 = vector.broadcast %cst_12 : f32 to vector<8x32xf32>
    %cst_13 = arith.constant 0.000000e+00 : f32
    %11 = vector.broadcast %cst_13 : f32 to vector<8x32xf32>
    %cst_14 = arith.constant 0.000000e+00 : f32
    %12 = vector.broadcast %cst_14 : f32 to vector<8x32xf32>
    %13 = vector.extract_strided_slice %5 {offsets = [0, 0], sizes = [8, 128], strides = [1, 1]} : vector<64x128xf32> to vector<8x128xf32>
    %cst_15 = arith.constant dense<0.000000e+00> : vector<8x128xf32>
    %14 = tpu.matmul %9, %6, %cst_15 {dimension_numbers = #tpu.dot_dimension_numbers<[1], [0], [0], [1], [0, 0, 1, 1], [], []>} : vector<8x32xf32>, vector<32x128xf32>, vector<8x128xf32> -> vector<8x128xf32>
    %15 = arith.addf %13, %14 : vector<8x128xf32>
    %16 = vector.extract_strided_slice %15 {offsets = [0, 0], sizes = [8, 32], strides = [1, 1]} : vector<8x128xf32> to vector<8x32xf32>
    %17 = arith.negf %16 : vector<8x32xf32>
    %18 = math.exp %17 : vector<8x32xf32>
    %cst_16 = arith.constant 1.000000e+00 : f32
    %19 = vector.broadcast %cst_16 : f32 to vector<8x32xf32>
    %20 = arith.addf %19, %18 : vector<8x32xf32>
    %21 = arith.divf %19, %20 : vector<8x32xf32>
    %22 = vector.extract_strided_slice %15 {offsets = [0, 32], sizes = [8, 32], strides = [1, 1]} : vector<8x128xf32> to vector<8x32xf32>
    %23 = arith.negf %22 : vector<8x32xf32>
    %24 = math.exp %23 : vector<8x32xf32>
    %cst_17 = arith.constant 1.000000e+00 : f32
    %25 = vector.broadcast %cst_17 : f32 to vector<8x32xf32>
    %26 = arith.addf %25, %24 : vector<8x32xf32>
    %27 = arith.divf %25, %26 : vector<8x32xf32>
    %28 = vector.extract_strided_slice %15 {offsets = [0, 64], sizes = [8, 32], strides = [1, 1]} : vector<8x128xf32> to vector<8x32xf32>
    %29 = math.tanh %28 : vector<8x32xf32>
    %30 = vector.extract_strided_slice %15 {offsets = [0, 96], sizes = [8, 32], strides = [1, 1]} : vector<8x128xf32> to vector<8x32xf32>
    %31 = arith.negf %30 : vector<8x32xf32>
    %32 = math.exp %31 : vector<8x32xf32>
    %cst_18 = arith.constant 1.000000e+00 : f32
    %33 = vector.broadcast %cst_18 : f32 to vector<8x32xf32>
    %34 = arith.addf %33, %32 : vector<8x32xf32>
    %35 = arith.divf %33, %34 : vector<8x32xf32>
    %36 = arith.mulf %27, %10 : vector<8x32xf32>
    %37 = arith.mulf %21, %29 : vector<8x32xf32>
    %38 = arith.addf %36, %37 : vector<8x32xf32>
    %39 = math.tanh %38 : vector<8x32xf32>
    %40 = arith.mulf %35, %39 : vector<8x32xf32>
    %41 = tpu.concatenate %40, %11 in 1 : vector<8x32xf32>, vector<8x32xf32> -> vector<8x64xf32>
    %cst_19 = arith.constant dense<0.000000e+00> : vector<8x128xf32>
    %42 = tpu.matmul %41, %7, %cst_19 {dimension_numbers = #tpu.dot_dimension_numbers<[1], [0], [0], [1], [0, 0, 1, 1], [], []>} : vector<8x64xf32>, vector<64x128xf32>, vector<8x128xf32> -> vector<8x128xf32>
    %43 = vector.broadcast %8 : vector<1x128xf32> to vector<8x128xf32>
    %44 = arith.addf %42, %43 : vector<8x128xf32>
    %45 = vector.extract_strided_slice %44 {offsets = [0, 0], sizes = [8, 32], strides = [1, 1]} : vector<8x128xf32> to vector<8x32xf32>
    %46 = arith.negf %45 : vector<8x32xf32>
    %47 = math.exp %46 : vector<8x32xf32>
    %cst_20 = arith.constant 1.000000e+00 : f32
    %48 = vector.broadcast %cst_20 : f32 to vector<8x32xf32>
    %49 = arith.addf %48, %47 : vector<8x32xf32>
    %50 = arith.divf %48, %49 : vector<8x32xf32>
    %51 = vector.extract_strided_slice %44 {offsets = [0, 32], sizes = [8, 32], strides = [1, 1]} : vector<8x128xf32> to vector<8x32xf32>
    %52 = arith.negf %51 : vector<8x32xf32>
    %53 = math.exp %52 : vector<8x32xf32>
    %cst_21 = arith.constant 1.000000e+00 : f32
    %54 = vector.broadcast %cst_21 : f32 to vector<8x32xf32>
    %55 = arith.addf %54, %53 : vector<8x32xf32>
    %56 = arith.divf %54, %55 : vector<8x32xf32>
    %57 = vector.extract_strided_slice %44 {offsets = [0, 64], sizes = [8, 32], strides = [1, 1]} : vector<8x128xf32> to vector<8x32xf32>
    %58 = math.tanh %57 : vector<8x32xf32>
    %59 = vector.extract_strided_slice %44 {offsets = [0, 96], sizes = [8, 32], strides = [1, 1]} : vector<8x128xf32> to vector<8x32xf32>
    %60 = arith.negf %59 : vector<8x32xf32>
    %61 = math.exp %60 : vector<8x32xf32>
    %cst_22 = arith.constant 1.000000e+00 : f32
    %62 = vector.broadcast %cst_22 : f32 to vector<8x32xf32>
    %63 = arith.addf %62, %61 : vector<8x32xf32>
    %64 = arith.divf %62, %63 : vector<8x32xf32>
    %65 = arith.mulf %56, %12 : vector<8x32xf32>
    %66 = arith.mulf %50, %58 : vector<8x32xf32>
    %67 = arith.addf %65, %66 : vector<8x32xf32>
    %68 = math.tanh %67 : vector<8x32xf32>
    %69 = arith.mulf %64, %68 : vector<8x32xf32>
    %70 = vector.extract_strided_slice %5 {offsets = [8, 0], sizes = [8, 128], strides = [1, 1]} : vector<64x128xf32> to vector<8x128xf32>
    %cst_23 = arith.constant dense<0.000000e+00> : vector<8x128xf32>
    %71 = tpu.matmul %40, %6, %cst_23 {dimension_numbers = #tpu.dot_dimension_numbers<[1], [0], [0], [1], [0, 0, 1, 1], [], []>} : vector<8x32xf32>, vector<32x128xf32>, vector<8x128xf32> -> vector<8x128xf32>
    %72 = arith.addf %70, %71 : vector<8x128xf32>
    %73 = vector.extract_strided_slice %72 {offsets = [0, 0], sizes = [8, 32], strides = [1, 1]} : vector<8x128xf32> to vector<8x32xf32>
    %74 = arith.negf %73 : vector<8x32xf32>
    %75 = math.exp %74 : vector<8x32xf32>
    %cst_24 = arith.constant 1.000000e+00 : f32
    %76 = vector.broadcast %cst_24 : f32 to vector<8x32xf32>
    %77 = arith.addf %76, %75 : vector<8x32xf32>
    %78 = arith.divf %76, %77 : vector<8x32xf32>
    %79 = vector.extract_strided_slice %72 {offsets = [0, 32], sizes = [8, 32], strides = [1, 1]} : vector<8x128xf32> to vector<8x32xf32>
    %80 = arith.negf %79 : vector<8x32xf32>
    %81 = math.exp %80 : vector<8x32xf32>
    %cst_25 = arith.constant 1.000000e+00 : f32
    %82 = vector.broadcast %cst_25 : f32 to vector<8x32xf32>
    %83 = arith.addf %82, %81 : vector<8x32xf32>
    %84 = arith.divf %82, %83 : vector<8x32xf32>
    %85 = vector.extract_strided_slice %72 {offsets = [0, 64], sizes = [8, 32], strides = [1, 1]} : vector<8x128xf32> to vector<8x32xf32>
    %86 = math.tanh %85 : vector<8x32xf32>
    %87 = vector.extract_strided_slice %72 {offsets = [0, 96], sizes = [8, 32], strides = [1, 1]} : vector<8x128xf32> to vector<8x32xf32>
    %88 = arith.negf %87 : vector<8x32xf32>
    %89 = math.exp %88 : vector<8x32xf32>
    %cst_26 = arith.constant 1.000000e+00 : f32
    %90 = vector.broadcast %cst_26 : f32 to vector<8x32xf32>
    %91 = arith.addf %90, %89 : vector<8x32xf32>
    %92 = arith.divf %90, %91 : vector<8x32xf32>
    %93 = arith.mulf %84, %38 : vector<8x32xf32>
    %94 = arith.mulf %78, %86 : vector<8x32xf32>
    %95 = arith.addf %93, %94 : vector<8x32xf32>
    %96 = math.tanh %95 : vector<8x32xf32>
    %97 = arith.mulf %92, %96 : vector<8x32xf32>
    %98 = tpu.concatenate %97, %69 in 1 : vector<8x32xf32>, vector<8x32xf32> -> vector<8x64xf32>
    %cst_27 = arith.constant dense<0.000000e+00> : vector<8x128xf32>
    %99 = tpu.matmul %98, %7, %cst_27 {dimension_numbers = #tpu.dot_dimension_numbers<[1], [0], [0], [1], [0, 0, 1, 1], [], []>} : vector<8x64xf32>, vector<64x128xf32>, vector<8x128xf32> -> vector<8x128xf32>
    %100 = vector.broadcast %8 : vector<1x128xf32> to vector<8x128xf32>
    %101 = arith.addf %99, %100 : vector<8x128xf32>
    %102 = vector.extract_strided_slice %101 {offsets = [0, 0], sizes = [8, 32], strides = [1, 1]} : vector<8x128xf32> to vector<8x32xf32>
    %103 = arith.negf %102 : vector<8x32xf32>
    %104 = math.exp %103 : vector<8x32xf32>
    %cst_28 = arith.constant 1.000000e+00 : f32
    %105 = vector.broadcast %cst_28 : f32 to vector<8x32xf32>
    %106 = arith.addf %105, %104 : vector<8x32xf32>
    %107 = arith.divf %105, %106 : vector<8x32xf32>
    %108 = vector.extract_strided_slice %101 {offsets = [0, 32], sizes = [8, 32], strides = [1, 1]} : vector<8x128xf32> to vector<8x32xf32>
    %109 = arith.negf %108 : vector<8x32xf32>
    %110 = math.exp %109 : vector<8x32xf32>
    %cst_29 = arith.constant 1.000000e+00 : f32
    %111 = vector.broadcast %cst_29 : f32 to vector<8x32xf32>
    %112 = arith.addf %111, %110 : vector<8x32xf32>
    %113 = arith.divf %111, %112 : vector<8x32xf32>
    %114 = vector.extract_strided_slice %101 {offsets = [0, 64], sizes = [8, 32], strides = [1, 1]} : vector<8x128xf32> to vector<8x32xf32>
    %115 = math.tanh %114 : vector<8x32xf32>
    %116 = vector.extract_strided_slice %101 {offsets = [0, 96], sizes = [8, 32], strides = [1, 1]} : vector<8x128xf32> to vector<8x32xf32>
    %117 = arith.negf %116 : vector<8x32xf32>
    %118 = math.exp %117 : vector<8x32xf32>
    %cst_30 = arith.constant 1.000000e+00 : f32
    %119 = vector.broadcast %cst_30 : f32 to vector<8x32xf32>
    %120 = arith.addf %119, %118 : vector<8x32xf32>
    %121 = arith.divf %119, %120 : vector<8x32xf32>
    %122 = arith.mulf %113, %67 : vector<8x32xf32>
    %123 = arith.mulf %107, %115 : vector<8x32xf32>
    %124 = arith.addf %122, %123 : vector<8x32xf32>
    %125 = math.tanh %124 : vector<8x32xf32>
    %126 = arith.mulf %121, %125 : vector<8x32xf32>
    %127 = vector.extract_strided_slice %5 {offsets = [16, 0], sizes = [8, 128], strides = [1, 1]} : vector<64x128xf32> to vector<8x128xf32>
    %cst_31 = arith.constant dense<0.000000e+00> : vector<8x128xf32>
    %128 = tpu.matmul %97, %6, %cst_31 {dimension_numbers = #tpu.dot_dimension_numbers<[1], [0], [0], [1], [0, 0, 1, 1], [], []>} : vector<8x32xf32>, vector<32x128xf32>, vector<8x128xf32> -> vector<8x128xf32>
    %129 = arith.addf %127, %128 : vector<8x128xf32>
    %130 = vector.extract_strided_slice %129 {offsets = [0, 0], sizes = [8, 32], strides = [1, 1]} : vector<8x128xf32> to vector<8x32xf32>
    %131 = arith.negf %130 : vector<8x32xf32>
    %132 = math.exp %131 : vector<8x32xf32>
    %cst_32 = arith.constant 1.000000e+00 : f32
    %133 = vector.broadcast %cst_32 : f32 to vector<8x32xf32>
    %134 = arith.addf %133, %132 : vector<8x32xf32>
    %135 = arith.divf %133, %134 : vector<8x32xf32>
    %136 = vector.extract_strided_slice %129 {offsets = [0, 32], sizes = [8, 32], strides = [1, 1]} : vector<8x128xf32> to vector<8x32xf32>
    %137 = arith.negf %136 : vector<8x32xf32>
    %138 = math.exp %137 : vector<8x32xf32>
    %cst_33 = arith.constant 1.000000e+00 : f32
    %139 = vector.broadcast %cst_33 : f32 to vector<8x32xf32>
    %140 = arith.addf %139, %138 : vector<8x32xf32>
    %141 = arith.divf %139, %140 : vector<8x32xf32>
    %142 = vector.extract_strided_slice %129 {offsets = [0, 64], sizes = [8, 32], strides = [1, 1]} : vector<8x128xf32> to vector<8x32xf32>
    %143 = math.tanh %142 : vector<8x32xf32>
    %144 = vector.extract_strided_slice %129 {offsets = [0, 96], sizes = [8, 32], strides = [1, 1]} : vector<8x128xf32> to vector<8x32xf32>
    %145 = arith.negf %144 : vector<8x32xf32>
    %146 = math.exp %145 : vector<8x32xf32>
    %cst_34 = arith.constant 1.000000e+00 : f32
    %147 = vector.broadcast %cst_34 : f32 to vector<8x32xf32>
    %148 = arith.addf %147, %146 : vector<8x32xf32>
    %149 = arith.divf %147, %148 : vector<8x32xf32>
    %150 = arith.mulf %141, %95 : vector<8x32xf32>
    %151 = arith.mulf %135, %143 : vector<8x32xf32>
    %152 = arith.addf %150, %151 : vector<8x32xf32>
    %153 = math.tanh %152 : vector<8x32xf32>
    %154 = arith.mulf %149, %153 : vector<8x32xf32>
    %155 = tpu.concatenate %154, %126 in 1 : vector<8x32xf32>, vector<8x32xf32> -> vector<8x64xf32>
    %cst_35 = arith.constant dense<0.000000e+00> : vector<8x128xf32>
    %156 = tpu.matmul %155, %7, %cst_35 {dimension_numbers = #tpu.dot_dimension_numbers<[1], [0], [0], [1], [0, 0, 1, 1], [], []>} : vector<8x64xf32>, vector<64x128xf32>, vector<8x128xf32> -> vector<8x128xf32>
    %157 = vector.broadcast %8 : vector<1x128xf32> to vector<8x128xf32>
    %158 = arith.addf %156, %157 : vector<8x128xf32>
    %159 = vector.extract_strided_slice %158 {offsets = [0, 0], sizes = [8, 32], strides = [1, 1]} : vector<8x128xf32> to vector<8x32xf32>
    %160 = arith.negf %159 : vector<8x32xf32>
    %161 = math.exp %160 : vector<8x32xf32>
    %cst_36 = arith.constant 1.000000e+00 : f32
    %162 = vector.broadcast %cst_36 : f32 to vector<8x32xf32>
    %163 = arith.addf %162, %161 : vector<8x32xf32>
    %164 = arith.divf %162, %163 : vector<8x32xf32>
    %165 = vector.extract_strided_slice %158 {offsets = [0, 32], sizes = [8, 32], strides = [1, 1]} : vector<8x128xf32> to vector<8x32xf32>
    %166 = arith.negf %165 : vector<8x32xf32>
    %167 = math.exp %166 : vector<8x32xf32>
    %cst_37 = arith.constant 1.000000e+00 : f32
    %168 = vector.broadcast %cst_37 : f32 to vector<8x32xf32>
    %169 = arith.addf %168, %167 : vector<8x32xf32>
    %170 = arith.divf %168, %169 : vector<8x32xf32>
    %171 = vector.extract_strided_slice %158 {offsets = [0, 64], sizes = [8, 32], strides = [1, 1]} : vector<8x128xf32> to vector<8x32xf32>
    %172 = math.tanh %171 : vector<8x32xf32>
    %173 = vector.extract_strided_slice %158 {offsets = [0, 96], sizes = [8, 32], strides = [1, 1]} : vector<8x128xf32> to vector<8x32xf32>
    %174 = arith.negf %173 : vector<8x32xf32>
    %175 = math.exp %174 : vector<8x32xf32>
    %cst_38 = arith.constant 1.000000e+00 : f32
    %176 = vector.broadcast %cst_38 : f32 to vector<8x32xf32>
    %177 = arith.addf %176, %175 : vector<8x32xf32>
    %178 = arith.divf %176, %177 : vector<8x32xf32>
    %179 = arith.mulf %170, %124 : vector<8x32xf32>
    %180 = arith.mulf %164, %172 : vector<8x32xf32>
    %181 = arith.addf %179, %180 : vector<8x32xf32>
    %182 = math.tanh %181 : vector<8x32xf32>
    %183 = arith.mulf %178, %182 : vector<8x32xf32>
    %184 = vector.extract_strided_slice %5 {offsets = [24, 0], sizes = [8, 128], strides = [1, 1]} : vector<64x128xf32> to vector<8x128xf32>
    %cst_39 = arith.constant dense<0.000000e+00> : vector<8x128xf32>
    %185 = tpu.matmul %154, %6, %cst_39 {dimension_numbers = #tpu.dot_dimension_numbers<[1], [0], [0], [1], [0, 0, 1, 1], [], []>} : vector<8x32xf32>, vector<32x128xf32>, vector<8x128xf32> -> vector<8x128xf32>
    %186 = arith.addf %184, %185 : vector<8x128xf32>
    %187 = vector.extract_strided_slice %186 {offsets = [0, 0], sizes = [8, 32], strides = [1, 1]} : vector<8x128xf32> to vector<8x32xf32>
    %188 = arith.negf %187 : vector<8x32xf32>
    %189 = math.exp %188 : vector<8x32xf32>
    %cst_40 = arith.constant 1.000000e+00 : f32
    %190 = vector.broadcast %cst_40 : f32 to vector<8x32xf32>
    %191 = arith.addf %190, %189 : vector<8x32xf32>
    %192 = arith.divf %190, %191 : vector<8x32xf32>
    %193 = vector.extract_strided_slice %186 {offsets = [0, 32], sizes = [8, 32], strides = [1, 1]} : vector<8x128xf32> to vector<8x32xf32>
    %194 = arith.negf %193 : vector<8x32xf32>
    %195 = math.exp %194 : vector<8x32xf32>
    %cst_41 = arith.constant 1.000000e+00 : f32
    %196 = vector.broadcast %cst_41 : f32 to vector<8x32xf32>
    %197 = arith.addf %196, %195 : vector<8x32xf32>
    %198 = arith.divf %196, %197 : vector<8x32xf32>
    %199 = vector.extract_strided_slice %186 {offsets = [0, 64], sizes = [8, 32], strides = [1, 1]} : vector<8x128xf32> to vector<8x32xf32>
    %200 = math.tanh %199 : vector<8x32xf32>
    %201 = vector.extract_strided_slice %186 {offsets = [0, 96], sizes = [8, 32], strides = [1, 1]} : vector<8x128xf32> to vector<8x32xf32>
    %202 = arith.negf %201 : vector<8x32xf32>
    %203 = math.exp %202 : vector<8x32xf32>
    %cst_42 = arith.constant 1.000000e+00 : f32
    %204 = vector.broadcast %cst_42 : f32 to vector<8x32xf32>
    %205 = arith.addf %204, %203 : vector<8x32xf32>
    %206 = arith.divf %204, %205 : vector<8x32xf32>
    %207 = arith.mulf %198, %152 : vector<8x32xf32>
    %208 = arith.mulf %192, %200 : vector<8x32xf32>
    %209 = arith.addf %207, %208 : vector<8x32xf32>
    %210 = math.tanh %209 : vector<8x32xf32>
    %211 = arith.mulf %206, %210 : vector<8x32xf32>
    %212 = tpu.concatenate %211, %183 in 1 : vector<8x32xf32>, vector<8x32xf32> -> vector<8x64xf32>
    %cst_43 = arith.constant dense<0.000000e+00> : vector<8x128xf32>
    %213 = tpu.matmul %212, %7, %cst_43 {dimension_numbers = #tpu.dot_dimension_numbers<[1], [0], [0], [1], [0, 0, 1, 1], [], []>} : vector<8x64xf32>, vector<64x128xf32>, vector<8x128xf32> -> vector<8x128xf32>
    %214 = vector.broadcast %8 : vector<1x128xf32> to vector<8x128xf32>
    %215 = arith.addf %213, %214 : vector<8x128xf32>
    %216 = vector.extract_strided_slice %215 {offsets = [0, 0], sizes = [8, 32], strides = [1, 1]} : vector<8x128xf32> to vector<8x32xf32>
    %217 = arith.negf %216 : vector<8x32xf32>
    %218 = math.exp %217 : vector<8x32xf32>
    %cst_44 = arith.constant 1.000000e+00 : f32
    %219 = vector.broadcast %cst_44 : f32 to vector<8x32xf32>
    %220 = arith.addf %219, %218 : vector<8x32xf32>
    %221 = arith.divf %219, %220 : vector<8x32xf32>
    %222 = vector.extract_strided_slice %215 {offsets = [0, 32], sizes = [8, 32], strides = [1, 1]} : vector<8x128xf32> to vector<8x32xf32>
    %223 = arith.negf %222 : vector<8x32xf32>
    %224 = math.exp %223 : vector<8x32xf32>
    %cst_45 = arith.constant 1.000000e+00 : f32
    %225 = vector.broadcast %cst_45 : f32 to vector<8x32xf32>
    %226 = arith.addf %225, %224 : vector<8x32xf32>
    %227 = arith.divf %225, %226 : vector<8x32xf32>
    %228 = vector.extract_strided_slice %215 {offsets = [0, 64], sizes = [8, 32], strides = [1, 1]} : vector<8x128xf32> to vector<8x32xf32>
    %229 = math.tanh %228 : vector<8x32xf32>
    %230 = vector.extract_strided_slice %215 {offsets = [0, 96], sizes = [8, 32], strides = [1, 1]} : vector<8x128xf32> to vector<8x32xf32>
    %231 = arith.negf %230 : vector<8x32xf32>
    %232 = math.exp %231 : vector<8x32xf32>
    %cst_46 = arith.constant 1.000000e+00 : f32
    %233 = vector.broadcast %cst_46 : f32 to vector<8x32xf32>
    %234 = arith.addf %233, %232 : vector<8x32xf32>
    %235 = arith.divf %233, %234 : vector<8x32xf32>
    %236 = arith.mulf %227, %181 : vector<8x32xf32>
    %237 = arith.mulf %221, %229 : vector<8x32xf32>
    %238 = arith.addf %236, %237 : vector<8x32xf32>
    %239 = math.tanh %238 : vector<8x32xf32>
    %240 = arith.mulf %235, %239 : vector<8x32xf32>
    %241 = vector.extract_strided_slice %5 {offsets = [32, 0], sizes = [8, 128], strides = [1, 1]} : vector<64x128xf32> to vector<8x128xf32>
    %cst_47 = arith.constant dense<0.000000e+00> : vector<8x128xf32>
    %242 = tpu.matmul %211, %6, %cst_47 {dimension_numbers = #tpu.dot_dimension_numbers<[1], [0], [0], [1], [0, 0, 1, 1], [], []>} : vector<8x32xf32>, vector<32x128xf32>, vector<8x128xf32> -> vector<8x128xf32>
    %243 = arith.addf %241, %242 : vector<8x128xf32>
    %244 = vector.extract_strided_slice %243 {offsets = [0, 0], sizes = [8, 32], strides = [1, 1]} : vector<8x128xf32> to vector<8x32xf32>
    %245 = arith.negf %244 : vector<8x32xf32>
    %246 = math.exp %245 : vector<8x32xf32>
    %cst_48 = arith.constant 1.000000e+00 : f32
    %247 = vector.broadcast %cst_48 : f32 to vector<8x32xf32>
    %248 = arith.addf %247, %246 : vector<8x32xf32>
    %249 = arith.divf %247, %248 : vector<8x32xf32>
    %250 = vector.extract_strided_slice %243 {offsets = [0, 32], sizes = [8, 32], strides = [1, 1]} : vector<8x128xf32> to vector<8x32xf32>
    %251 = arith.negf %250 : vector<8x32xf32>
    %252 = math.exp %251 : vector<8x32xf32>
    %cst_49 = arith.constant 1.000000e+00 : f32
    %253 = vector.broadcast %cst_49 : f32 to vector<8x32xf32>
    %254 = arith.addf %253, %252 : vector<8x32xf32>
    %255 = arith.divf %253, %254 : vector<8x32xf32>
    %256 = vector.extract_strided_slice %243 {offsets = [0, 64], sizes = [8, 32], strides = [1, 1]} : vector<8x128xf32> to vector<8x32xf32>
    %257 = math.tanh %256 : vector<8x32xf32>
    %258 = vector.extract_strided_slice %243 {offsets = [0, 96], sizes = [8, 32], strides = [1, 1]} : vector<8x128xf32> to vector<8x32xf32>
    %259 = arith.negf %258 : vector<8x32xf32>
    %260 = math.exp %259 : vector<8x32xf32>
    %cst_50 = arith.constant 1.000000e+00 : f32
    %261 = vector.broadcast %cst_50 : f32 to vector<8x32xf32>
    %262 = arith.addf %261, %260 : vector<8x32xf32>
    %263 = arith.divf %261, %262 : vector<8x32xf32>
    %264 = arith.mulf %255, %209 : vector<8x32xf32>
    %265 = arith.mulf %249, %257 : vector<8x32xf32>
    %266 = arith.addf %264, %265 : vector<8x32xf32>
    %267 = math.tanh %266 : vector<8x32xf32>
    %268 = arith.mulf %263, %267 : vector<8x32xf32>
    %269 = tpu.concatenate %268, %240 in 1 : vector<8x32xf32>, vector<8x32xf32> -> vector<8x64xf32>
    %cst_51 = arith.constant dense<0.000000e+00> : vector<8x128xf32>
    %270 = tpu.matmul %269, %7, %cst_51 {dimension_numbers = #tpu.dot_dimension_numbers<[1], [0], [0], [1], [0, 0, 1, 1], [], []>} : vector<8x64xf32>, vector<64x128xf32>, vector<8x128xf32> -> vector<8x128xf32>
    %271 = vector.broadcast %8 : vector<1x128xf32> to vector<8x128xf32>
    %272 = arith.addf %270, %271 : vector<8x128xf32>
    %273 = vector.extract_strided_slice %272 {offsets = [0, 0], sizes = [8, 32], strides = [1, 1]} : vector<8x128xf32> to vector<8x32xf32>
    %274 = arith.negf %273 : vector<8x32xf32>
    %275 = math.exp %274 : vector<8x32xf32>
    %cst_52 = arith.constant 1.000000e+00 : f32
    %276 = vector.broadcast %cst_52 : f32 to vector<8x32xf32>
    %277 = arith.addf %276, %275 : vector<8x32xf32>
    %278 = arith.divf %276, %277 : vector<8x32xf32>
    %279 = vector.extract_strided_slice %272 {offsets = [0, 32], sizes = [8, 32], strides = [1, 1]} : vector<8x128xf32> to vector<8x32xf32>
    %280 = arith.negf %279 : vector<8x32xf32>
    %281 = math.exp %280 : vector<8x32xf32>
    %cst_53 = arith.constant 1.000000e+00 : f32
    %282 = vector.broadcast %cst_53 : f32 to vector<8x32xf32>
    %283 = arith.addf %282, %281 : vector<8x32xf32>
    %284 = arith.divf %282, %283 : vector<8x32xf32>
    %285 = vector.extract_strided_slice %272 {offsets = [0, 64], sizes = [8, 32], strides = [1, 1]} : vector<8x128xf32> to vector<8x32xf32>
    %286 = math.tanh %285 : vector<8x32xf32>
    %287 = vector.extract_strided_slice %272 {offsets = [0, 96], sizes = [8, 32], strides = [1, 1]} : vector<8x128xf32> to vector<8x32xf32>
    %288 = arith.negf %287 : vector<8x32xf32>
    %289 = math.exp %288 : vector<8x32xf32>
    %cst_54 = arith.constant 1.000000e+00 : f32
    %290 = vector.broadcast %cst_54 : f32 to vector<8x32xf32>
    %291 = arith.addf %290, %289 : vector<8x32xf32>
    %292 = arith.divf %290, %291 : vector<8x32xf32>
    %293 = arith.mulf %284, %238 : vector<8x32xf32>
    %294 = arith.mulf %278, %286 : vector<8x32xf32>
    %295 = arith.addf %293, %294 : vector<8x32xf32>
    %296 = math.tanh %295 : vector<8x32xf32>
    %297 = arith.mulf %292, %296 : vector<8x32xf32>
    %298 = vector.extract_strided_slice %5 {offsets = [40, 0], sizes = [8, 128], strides = [1, 1]} : vector<64x128xf32> to vector<8x128xf32>
    %cst_55 = arith.constant dense<0.000000e+00> : vector<8x128xf32>
    %299 = tpu.matmul %268, %6, %cst_55 {dimension_numbers = #tpu.dot_dimension_numbers<[1], [0], [0], [1], [0, 0, 1, 1], [], []>} : vector<8x32xf32>, vector<32x128xf32>, vector<8x128xf32> -> vector<8x128xf32>
    %300 = arith.addf %298, %299 : vector<8x128xf32>
    %301 = vector.extract_strided_slice %300 {offsets = [0, 0], sizes = [8, 32], strides = [1, 1]} : vector<8x128xf32> to vector<8x32xf32>
    %302 = arith.negf %301 : vector<8x32xf32>
    %303 = math.exp %302 : vector<8x32xf32>
    %cst_56 = arith.constant 1.000000e+00 : f32
    %304 = vector.broadcast %cst_56 : f32 to vector<8x32xf32>
    %305 = arith.addf %304, %303 : vector<8x32xf32>
    %306 = arith.divf %304, %305 : vector<8x32xf32>
    %307 = vector.extract_strided_slice %300 {offsets = [0, 32], sizes = [8, 32], strides = [1, 1]} : vector<8x128xf32> to vector<8x32xf32>
    %308 = arith.negf %307 : vector<8x32xf32>
    %309 = math.exp %308 : vector<8x32xf32>
    %cst_57 = arith.constant 1.000000e+00 : f32
    %310 = vector.broadcast %cst_57 : f32 to vector<8x32xf32>
    %311 = arith.addf %310, %309 : vector<8x32xf32>
    %312 = arith.divf %310, %311 : vector<8x32xf32>
    %313 = vector.extract_strided_slice %300 {offsets = [0, 64], sizes = [8, 32], strides = [1, 1]} : vector<8x128xf32> to vector<8x32xf32>
    %314 = math.tanh %313 : vector<8x32xf32>
    %315 = vector.extract_strided_slice %300 {offsets = [0, 96], sizes = [8, 32], strides = [1, 1]} : vector<8x128xf32> to vector<8x32xf32>
    %316 = arith.negf %315 : vector<8x32xf32>
    %317 = math.exp %316 : vector<8x32xf32>
    %cst_58 = arith.constant 1.000000e+00 : f32
    %318 = vector.broadcast %cst_58 : f32 to vector<8x32xf32>
    %319 = arith.addf %318, %317 : vector<8x32xf32>
    %320 = arith.divf %318, %319 : vector<8x32xf32>
    %321 = arith.mulf %312, %266 : vector<8x32xf32>
    %322 = arith.mulf %306, %314 : vector<8x32xf32>
    %323 = arith.addf %321, %322 : vector<8x32xf32>
    %324 = math.tanh %323 : vector<8x32xf32>
    %325 = arith.mulf %320, %324 : vector<8x32xf32>
    %326 = tpu.concatenate %325, %297 in 1 : vector<8x32xf32>, vector<8x32xf32> -> vector<8x64xf32>
    %cst_59 = arith.constant dense<0.000000e+00> : vector<8x128xf32>
    %327 = tpu.matmul %326, %7, %cst_59 {dimension_numbers = #tpu.dot_dimension_numbers<[1], [0], [0], [1], [0, 0, 1, 1], [], []>} : vector<8x64xf32>, vector<64x128xf32>, vector<8x128xf32> -> vector<8x128xf32>
    %328 = vector.broadcast %8 : vector<1x128xf32> to vector<8x128xf32>
    %329 = arith.addf %327, %328 : vector<8x128xf32>
    %330 = vector.extract_strided_slice %329 {offsets = [0, 0], sizes = [8, 32], strides = [1, 1]} : vector<8x128xf32> to vector<8x32xf32>
    %331 = arith.negf %330 : vector<8x32xf32>
    %332 = math.exp %331 : vector<8x32xf32>
    %cst_60 = arith.constant 1.000000e+00 : f32
    %333 = vector.broadcast %cst_60 : f32 to vector<8x32xf32>
    %334 = arith.addf %333, %332 : vector<8x32xf32>
    %335 = arith.divf %333, %334 : vector<8x32xf32>
    %336 = vector.extract_strided_slice %329 {offsets = [0, 32], sizes = [8, 32], strides = [1, 1]} : vector<8x128xf32> to vector<8x32xf32>
    %337 = arith.negf %336 : vector<8x32xf32>
    %338 = math.exp %337 : vector<8x32xf32>
    %cst_61 = arith.constant 1.000000e+00 : f32
    %339 = vector.broadcast %cst_61 : f32 to vector<8x32xf32>
    %340 = arith.addf %339, %338 : vector<8x32xf32>
    %341 = arith.divf %339, %340 : vector<8x32xf32>
    %342 = vector.extract_strided_slice %329 {offsets = [0, 64], sizes = [8, 32], strides = [1, 1]} : vector<8x128xf32> to vector<8x32xf32>
    %343 = math.tanh %342 : vector<8x32xf32>
    %344 = vector.extract_strided_slice %329 {offsets = [0, 96], sizes = [8, 32], strides = [1, 1]} : vector<8x128xf32> to vector<8x32xf32>
    %345 = arith.negf %344 : vector<8x32xf32>
    %346 = math.exp %345 : vector<8x32xf32>
    %cst_62 = arith.constant 1.000000e+00 : f32
    %347 = vector.broadcast %cst_62 : f32 to vector<8x32xf32>
    %348 = arith.addf %347, %346 : vector<8x32xf32>
    %349 = arith.divf %347, %348 : vector<8x32xf32>
    %350 = arith.mulf %341, %295 : vector<8x32xf32>
    %351 = arith.mulf %335, %343 : vector<8x32xf32>
    %352 = arith.addf %350, %351 : vector<8x32xf32>
    %353 = math.tanh %352 : vector<8x32xf32>
    %354 = arith.mulf %349, %353 : vector<8x32xf32>
    %355 = vector.extract_strided_slice %5 {offsets = [48, 0], sizes = [8, 128], strides = [1, 1]} : vector<64x128xf32> to vector<8x128xf32>
    %cst_63 = arith.constant dense<0.000000e+00> : vector<8x128xf32>
    %356 = tpu.matmul %325, %6, %cst_63 {dimension_numbers = #tpu.dot_dimension_numbers<[1], [0], [0], [1], [0, 0, 1, 1], [], []>} : vector<8x32xf32>, vector<32x128xf32>, vector<8x128xf32> -> vector<8x128xf32>
    %357 = arith.addf %355, %356 : vector<8x128xf32>
    %358 = vector.extract_strided_slice %357 {offsets = [0, 0], sizes = [8, 32], strides = [1, 1]} : vector<8x128xf32> to vector<8x32xf32>
    %359 = arith.negf %358 : vector<8x32xf32>
    %360 = math.exp %359 : vector<8x32xf32>
    %cst_64 = arith.constant 1.000000e+00 : f32
    %361 = vector.broadcast %cst_64 : f32 to vector<8x32xf32>
    %362 = arith.addf %361, %360 : vector<8x32xf32>
    %363 = arith.divf %361, %362 : vector<8x32xf32>
    %364 = vector.extract_strided_slice %357 {offsets = [0, 32], sizes = [8, 32], strides = [1, 1]} : vector<8x128xf32> to vector<8x32xf32>
    %365 = arith.negf %364 : vector<8x32xf32>
    %366 = math.exp %365 : vector<8x32xf32>
    %cst_65 = arith.constant 1.000000e+00 : f32
    %367 = vector.broadcast %cst_65 : f32 to vector<8x32xf32>
    %368 = arith.addf %367, %366 : vector<8x32xf32>
    %369 = arith.divf %367, %368 : vector<8x32xf32>
    %370 = vector.extract_strided_slice %357 {offsets = [0, 64], sizes = [8, 32], strides = [1, 1]} : vector<8x128xf32> to vector<8x32xf32>
    %371 = math.tanh %370 : vector<8x32xf32>
    %372 = vector.extract_strided_slice %357 {offsets = [0, 96], sizes = [8, 32], strides = [1, 1]} : vector<8x128xf32> to vector<8x32xf32>
    %373 = arith.negf %372 : vector<8x32xf32>
    %374 = math.exp %373 : vector<8x32xf32>
    %cst_66 = arith.constant 1.000000e+00 : f32
    %375 = vector.broadcast %cst_66 : f32 to vector<8x32xf32>
    %376 = arith.addf %375, %374 : vector<8x32xf32>
    %377 = arith.divf %375, %376 : vector<8x32xf32>
    %378 = arith.mulf %369, %323 : vector<8x32xf32>
    %379 = arith.mulf %363, %371 : vector<8x32xf32>
    %380 = arith.addf %378, %379 : vector<8x32xf32>
    %381 = math.tanh %380 : vector<8x32xf32>
    %382 = arith.mulf %377, %381 : vector<8x32xf32>
    %383 = tpu.concatenate %382, %354 in 1 : vector<8x32xf32>, vector<8x32xf32> -> vector<8x64xf32>
    %cst_67 = arith.constant dense<0.000000e+00> : vector<8x128xf32>
    %384 = tpu.matmul %383, %7, %cst_67 {dimension_numbers = #tpu.dot_dimension_numbers<[1], [0], [0], [1], [0, 0, 1, 1], [], []>} : vector<8x64xf32>, vector<64x128xf32>, vector<8x128xf32> -> vector<8x128xf32>
    %385 = vector.broadcast %8 : vector<1x128xf32> to vector<8x128xf32>
    %386 = arith.addf %384, %385 : vector<8x128xf32>
    %387 = vector.extract_strided_slice %386 {offsets = [0, 0], sizes = [8, 32], strides = [1, 1]} : vector<8x128xf32> to vector<8x32xf32>
    %388 = arith.negf %387 : vector<8x32xf32>
    %389 = math.exp %388 : vector<8x32xf32>
    %cst_68 = arith.constant 1.000000e+00 : f32
    %390 = vector.broadcast %cst_68 : f32 to vector<8x32xf32>
    %391 = arith.addf %390, %389 : vector<8x32xf32>
    %392 = arith.divf %390, %391 : vector<8x32xf32>
    %393 = vector.extract_strided_slice %386 {offsets = [0, 32], sizes = [8, 32], strides = [1, 1]} : vector<8x128xf32> to vector<8x32xf32>
    %394 = arith.negf %393 : vector<8x32xf32>
    %395 = math.exp %394 : vector<8x32xf32>
    %cst_69 = arith.constant 1.000000e+00 : f32
    %396 = vector.broadcast %cst_69 : f32 to vector<8x32xf32>
    %397 = arith.addf %396, %395 : vector<8x32xf32>
    %398 = arith.divf %396, %397 : vector<8x32xf32>
    %399 = vector.extract_strided_slice %386 {offsets = [0, 64], sizes = [8, 32], strides = [1, 1]} : vector<8x128xf32> to vector<8x32xf32>
    %400 = math.tanh %399 : vector<8x32xf32>
    %401 = vector.extract_strided_slice %386 {offsets = [0, 96], sizes = [8, 32], strides = [1, 1]} : vector<8x128xf32> to vector<8x32xf32>
    %402 = arith.negf %401 : vector<8x32xf32>
    %403 = math.exp %402 : vector<8x32xf32>
    %cst_70 = arith.constant 1.000000e+00 : f32
    %404 = vector.broadcast %cst_70 : f32 to vector<8x32xf32>
    %405 = arith.addf %404, %403 : vector<8x32xf32>
    %406 = arith.divf %404, %405 : vector<8x32xf32>
    %407 = arith.mulf %398, %352 : vector<8x32xf32>
    %408 = arith.mulf %392, %400 : vector<8x32xf32>
    %409 = arith.addf %407, %408 : vector<8x32xf32>
    %410 = math.tanh %409 : vector<8x32xf32>
    %411 = arith.mulf %406, %410 : vector<8x32xf32>
    %412 = vector.extract_strided_slice %5 {offsets = [56, 0], sizes = [8, 128], strides = [1, 1]} : vector<64x128xf32> to vector<8x128xf32>
    %cst_71 = arith.constant dense<0.000000e+00> : vector<8x128xf32>
    %413 = tpu.matmul %382, %6, %cst_71 {dimension_numbers = #tpu.dot_dimension_numbers<[1], [0], [0], [1], [0, 0, 1, 1], [], []>} : vector<8x32xf32>, vector<32x128xf32>, vector<8x128xf32> -> vector<8x128xf32>
    %414 = arith.addf %412, %413 : vector<8x128xf32>
    %415 = vector.extract_strided_slice %414 {offsets = [0, 0], sizes = [8, 32], strides = [1, 1]} : vector<8x128xf32> to vector<8x32xf32>
    %416 = arith.negf %415 : vector<8x32xf32>
    %417 = math.exp %416 : vector<8x32xf32>
    %cst_72 = arith.constant 1.000000e+00 : f32
    %418 = vector.broadcast %cst_72 : f32 to vector<8x32xf32>
    %419 = arith.addf %418, %417 : vector<8x32xf32>
    %420 = arith.divf %418, %419 : vector<8x32xf32>
    %421 = vector.extract_strided_slice %414 {offsets = [0, 32], sizes = [8, 32], strides = [1, 1]} : vector<8x128xf32> to vector<8x32xf32>
    %422 = arith.negf %421 : vector<8x32xf32>
    %423 = math.exp %422 : vector<8x32xf32>
    %cst_73 = arith.constant 1.000000e+00 : f32
    %424 = vector.broadcast %cst_73 : f32 to vector<8x32xf32>
    %425 = arith.addf %424, %423 : vector<8x32xf32>
    %426 = arith.divf %424, %425 : vector<8x32xf32>
    %427 = vector.extract_strided_slice %414 {offsets = [0, 64], sizes = [8, 32], strides = [1, 1]} : vector<8x128xf32> to vector<8x32xf32>
    %428 = math.tanh %427 : vector<8x32xf32>
    %429 = vector.extract_strided_slice %414 {offsets = [0, 96], sizes = [8, 32], strides = [1, 1]} : vector<8x128xf32> to vector<8x32xf32>
    %430 = arith.negf %429 : vector<8x32xf32>
    %431 = math.exp %430 : vector<8x32xf32>
    %cst_74 = arith.constant 1.000000e+00 : f32
    %432 = vector.broadcast %cst_74 : f32 to vector<8x32xf32>
    %433 = arith.addf %432, %431 : vector<8x32xf32>
    %434 = arith.divf %432, %433 : vector<8x32xf32>
    %435 = arith.mulf %426, %380 : vector<8x32xf32>
    %436 = arith.mulf %420, %428 : vector<8x32xf32>
    %437 = arith.addf %435, %436 : vector<8x32xf32>
    %438 = math.tanh %437 : vector<8x32xf32>
    %439 = arith.mulf %434, %438 : vector<8x32xf32>
    %440 = tpu.concatenate %439, %411 in 1 : vector<8x32xf32>, vector<8x32xf32> -> vector<8x64xf32>
    %cst_75 = arith.constant dense<0.000000e+00> : vector<8x128xf32>
    %441 = tpu.matmul %440, %7, %cst_75 {dimension_numbers = #tpu.dot_dimension_numbers<[1], [0], [0], [1], [0, 0, 1, 1], [], []>} : vector<8x64xf32>, vector<64x128xf32>, vector<8x128xf32> -> vector<8x128xf32>
    %442 = vector.broadcast %8 : vector<1x128xf32> to vector<8x128xf32>
    %443 = arith.addf %441, %442 : vector<8x128xf32>
    %444 = vector.extract_strided_slice %443 {offsets = [0, 0], sizes = [8, 32], strides = [1, 1]} : vector<8x128xf32> to vector<8x32xf32>
    %445 = arith.negf %444 : vector<8x32xf32>
    %446 = math.exp %445 : vector<8x32xf32>
    %cst_76 = arith.constant 1.000000e+00 : f32
    %447 = vector.broadcast %cst_76 : f32 to vector<8x32xf32>
    %448 = arith.addf %447, %446 : vector<8x32xf32>
    %449 = arith.divf %447, %448 : vector<8x32xf32>
    %450 = vector.extract_strided_slice %443 {offsets = [0, 32], sizes = [8, 32], strides = [1, 1]} : vector<8x128xf32> to vector<8x32xf32>
    %451 = arith.negf %450 : vector<8x32xf32>
    %452 = math.exp %451 : vector<8x32xf32>
    %cst_77 = arith.constant 1.000000e+00 : f32
    %453 = vector.broadcast %cst_77 : f32 to vector<8x32xf32>
    %454 = arith.addf %453, %452 : vector<8x32xf32>
    %455 = arith.divf %453, %454 : vector<8x32xf32>
    %456 = vector.extract_strided_slice %443 {offsets = [0, 64], sizes = [8, 32], strides = [1, 1]} : vector<8x128xf32> to vector<8x32xf32>
    %457 = math.tanh %456 : vector<8x32xf32>
    %458 = vector.extract_strided_slice %443 {offsets = [0, 96], sizes = [8, 32], strides = [1, 1]} : vector<8x128xf32> to vector<8x32xf32>
    %459 = arith.negf %458 : vector<8x32xf32>
    %460 = math.exp %459 : vector<8x32xf32>
    %cst_78 = arith.constant 1.000000e+00 : f32
    %461 = vector.broadcast %cst_78 : f32 to vector<8x32xf32>
    %462 = arith.addf %461, %460 : vector<8x32xf32>
    %463 = arith.divf %461, %462 : vector<8x32xf32>
    %464 = arith.mulf %455, %409 : vector<8x32xf32>
    %465 = arith.mulf %449, %457 : vector<8x32xf32>
    %466 = arith.addf %464, %465 : vector<8x32xf32>
    %467 = math.tanh %466 : vector<8x32xf32>
    %468 = arith.mulf %463, %467 : vector<8x32xf32>
    %c0_79 = arith.constant 0 : index
    %c0_80 = arith.constant 0 : index
    %469 = vector.load %arg7[%c0_79, %c0_80] : memref<32x128xf32, #tpu.memory_space<vmem>>, vector<32x128xf32>
    %cst_81 = arith.constant dense<0.000000e+00> : vector<8x128xf32>
    %470 = tpu.matmul %468, %469, %cst_81 {dimension_numbers = #tpu.dot_dimension_numbers<[1], [0], [0], [1], [0, 0, 1, 1], [], []>} : vector<8x32xf32>, vector<32x128xf32>, vector<8x128xf32> -> vector<8x128xf32>
    %c0_82 = arith.constant 0 : index
    %c0_83 = arith.constant 0 : index
    %471 = vector.load %arg8[%c0_82, %c0_83] : memref<1x128xf32, #tpu.memory_space<vmem>>, vector<1x128xf32>
    %472 = vector.broadcast %471 : vector<1x128xf32> to vector<8x128xf32>
    %473 = arith.addf %470, %472 : vector<8x128xf32>
    %c0_84 = arith.constant 0 : index
    %c0_85 = arith.constant 0 : index
    %474 = vector.load %arg9[%c0_84, %c0_85] : memref<8x128xf32, #tpu.memory_space<vmem>>, vector<8x128xf32>
    tpu.vector_store %arg9[%c0_84, %c0_85], %473 {strides = array<i32>} : memref<8x128xf32, #tpu.memory_space<vmem>>, vector<8x128xf32>,
    %c0_86 = arith.constant 0 : index
    %c0_87 = arith.constant 0 : index
    %c0_88 = arith.constant 0 : index
    %475 = vector.load %arg10[%c0_86, %c0_87, %c0_88] : memref<2x8x32xf32, #tpu.memory_space<vmem>>, vector<1x8x32xf32>
    %476 = vector.shape_cast %475 : vector<1x8x32xf32> to vector<8x32xf32>
    %477 = vector.shape_cast %439 : vector<8x32xf32> to vector<1x8x32xf32>
    tpu.vector_store %arg10[%c0_86, %c0_87, %c0_88], %477 {strides = array<i32>} : memref<2x8x32xf32, #tpu.memory_space<vmem>>, vector<1x8x32xf32>,
    %c1 = arith.constant 1 : index
    %c0_89 = arith.constant 0 : index
    %c0_90 = arith.constant 0 : index
    %478 = vector.load %arg10[%c1, %c0_89, %c0_90] : memref<2x8x32xf32, #tpu.memory_space<vmem>>, vector<1x8x32xf32>
    %479 = vector.shape_cast %478 : vector<1x8x32xf32> to vector<8x32xf32>
    %480 = vector.shape_cast %468 : vector<8x32xf32> to vector<1x8x32xf32>
    tpu.vector_store %arg10[%c1, %c0_89, %c0_90], %480 {strides = array<i32>} : memref<2x8x32xf32, #tpu.memory_space<vmem>>, vector<1x8x32xf32>,
    %c0_91 = arith.constant 0 : index
    %c0_92 = arith.constant 0 : index
    %c0_93 = arith.constant 0 : index
    %481 = vector.load %arg11[%c0_91, %c0_92, %c0_93] : memref<2x8x32xf32, #tpu.memory_space<vmem>>, vector<1x8x32xf32>
    %482 = vector.shape_cast %481 : vector<1x8x32xf32> to vector<8x32xf32>
    %483 = vector.shape_cast %437 : vector<8x32xf32> to vector<1x8x32xf32>
    tpu.vector_store %arg11[%c0_91, %c0_92, %c0_93], %483 {strides = array<i32>} : memref<2x8x32xf32, #tpu.memory_space<vmem>>, vector<1x8x32xf32>,
    %c1_94 = arith.constant 1 : index
    %c0_95 = arith.constant 0 : index
    %c0_96 = arith.constant 0 : index
    %484 = vector.load %arg11[%c1_94, %c0_95, %c0_96] : memref<2x8x32xf32, #tpu.memory_space<vmem>>, vector<1x8x32xf32>
    %485 = vector.shape_cast %484 : vector<1x8x32xf32> to vector<8x32xf32>
    %486 = vector.shape_cast %466 : vector<8x32xf32> to vector<1x8x32xf32>
    tpu.vector_store %arg11[%c1_94, %c0_95, %c0_96], %486 {strides = array<i32>} : memref<2x8x32xf32, #tpu.memory_space<vmem>>, vector<1x8x32xf32>,
    return
  }
  func.func @transform_0(%arg0: i32) -> (i32, i32) {
    %c0_i32 = arith.constant 0 : i32
    %c0_i32_0 = arith.constant 0 : i32
    %c0_i32_1 = arith.constant 0 : i32
    return %c0_i32, %c0_i32_0 : i32, i32
  }
  func.func @transform_1(%arg0: i32) -> (i32, i32) {
    %c0_i32 = arith.constant 0 : i32
    %c0_i32_0 = arith.constant 0 : i32
    %c0_i32_1 = arith.constant 0 : i32
    return %c0_i32, %c0_i32_0 : i32, i32
  }
  func.func @transform_2(%arg0: i32) -> (i32, i32) {
    %c0_i32 = arith.constant 0 : i32
    %c0_i32_0 = arith.constant 0 : i32
    %c0_i32_1 = arith.constant 0 : i32
    return %c0_i32, %c0_i32_0 : i32, i32
  }
  func.func @transform_3(%arg0: i32) -> (i32, i32) {
    %c0_i32 = arith.constant 0 : i32
    %c0_i32_0 = arith.constant 0 : i32
    %c0_i32_1 = arith.constant 0 : i32
    return %c0_i32, %c0_i32_0 : i32, i32
  }
  func.func @transform_4(%arg0: i32) -> (i32, i32) {
    %c0_i32 = arith.constant 0 : i32
    %c0_i32_0 = arith.constant 0 : i32
    %c0_i32_1 = arith.constant 0 : i32
    return %c0_i32, %c0_i32_0 : i32, i32
  }
  func.func @transform_5(%arg0: i32) -> (i32, i32) {
    %c0_i32 = arith.constant 0 : i32
    %c0_i32_0 = arith.constant 0 : i32
    %c0_i32_1 = arith.constant 0 : i32
    return %c0_i32, %c0_i32_0 : i32, i32
  }
  func.func @transform_6(%arg0: i32) -> (i32, i32) {
    %c0_i32 = arith.constant 0 : i32
    %c0_i32_0 = arith.constant 0 : i32
    %c0_i32_1 = arith.constant 0 : i32
    return %c0_i32, %c0_i32_0 : i32, i32
  }
  func.func @transform_7(%arg0: i32) -> (i32, i32) {
    %c0_i32 = arith.constant 0 : i32
    %c0_i32_0 = arith.constant 0 : i32
    %c0_i32_1 = arith.constant 0 : i32
    return %c0_i32, %c0_i32_0 : i32, i32
  }
  func.func @transform_8(%arg0: i32) -> (i32, i32) {
    %c0_i32 = arith.constant 0 : i32
    %c0_i32_0 = arith.constant 0 : i32
    %c0_i32_1 = arith.constant 0 : i32
    return %c0_i32, %c0_i32_0 : i32, i32
  }
  func.func @transform_9(%arg0: i32) -> (i32, i32, i32) {
    %c0_i32 = arith.constant 0 : i32
    %c0_i32_0 = arith.constant 0 : i32
    %c0_i32_1 = arith.constant 0 : i32
    %c0_i32_2 = arith.constant 0 : i32
    return %c0_i32, %c0_i32_0, %c0_i32_1 : i32, i32, i32
  }
  func.func @transform_10(%arg0: i32) -> (i32, i32, i32) {
    %c0_i32 = arith.constant 0 : i32
    %c0_i32_0 = arith.constant 0 : i32
    %c0_i32_1 = arith.constant 0 : i32
    %c0_i32_2 = arith.constant 0 : i32
    return %c0_i32, %c0_i32_0, %c0_i32_1 : i32, i32, i32
  }
}

</mosaic_0001>

<llo_original>
// kernel: tpu_custom_call.1
$region0: #{tpu_custom_call.1}
  #allocation0 [shape = 'u32[]', space=smem, size = 0x4, offset = 0x4, fixed_abs, tag = 'smem constant byte address 0x4 - core index']
  #allocation1 [shape = 'u32[144,128]{1,0:T(1,128)}', space=vmem, size = 0x12000, scoped, tag = 'internal scratch']
  %s0 = inlined_call_operand.vmem [shape: f32[64,16], index: 0, kind: input, shape index: {}]
  %s1 = inlined_call_operand.vmem [shape: f32[16,128], index: 1, kind: input, shape index: {}]
  %s2 = inlined_call_operand.hbm [shape: f32[32,128], index: 2, kind: input, shape index: {}]
  %s3 = inlined_call_operand.vmem [shape: f32[1,128], index: 3, kind: input, shape index: {}]
  %s4 = inlined_call_operand.vmem [shape: f32[64,128], index: 4, kind: input, shape index: {}]
  %s5 = inlined_call_operand.vmem [shape: f32[1,128], index: 5, kind: input, shape index: {}]
  %s6 = inlined_call_operand.hbm [shape: f32[32,128], index: 6, kind: input, shape index: {}]
  %s7 = inlined_call_operand.vmem [shape: f32[1,128], index: 7, kind: input, shape index: {}]
  %s8 = inlined_call_operand.hbm [shape: f32[8,128], index: 8, kind: output, shape index: {0}]
  %s9 = inlined_call_operand.hbm [shape: f32[2,8,32], index: 9, kind: output, shape index: {1}]
  %s10 = inlined_call_operand.hbm [shape: f32[2,8,32], index: 10, kind: output, shape index: {2}]
  %11 = xla_tuple %s8, %s9, %s10
  %s12 = sld [smem:[#allocation0]]
  $region66: #{tpu_custom_call.1} parent=0
    _
  %s14 = ssub.s32 1, %s12
  %s15 = scalar_select 0, %s14, %s12
  $region1: #{tpu_custom_call.1} parent=0
    #allocation2 [shape = 'u8[16384]{0}', space=vmem, size = 0x4000, scoped, tag = 'input window, operand 2, single buffered']
    #allocation3 [shape = 's32[1]{0}', space=sflag, size = 0x4, scoped, tag = 'scoped memory for tpu_custom_call.1']
    #allocation4 [shape = 's32[1]{0}', space=sflag, size = 0x4, scoped, tag = 'scoped memory for tpu_custom_call.1']
    #allocation5 [shape = 'u8[16384]{0}', space=vmem, size = 0x4000, scoped, tag = 'input window, operand 6, single buffered']
    #allocation6 [shape = 's32[1]{0}', space=sflag, size = 0x4, scoped, tag = 'scoped memory for tpu_custom_call.1']
    #allocation7 [shape = 'u8[4096]{0}', space=vmem, size = 0x1000, scoped, tag = 'output window, operand 0, single buffered']
    #allocation8 [shape = 'u8[8192]{0}', space=vmem, size = 0x2000, scoped, tag = 'output window, operand 1, single buffered']
    #allocation9 [shape = 's32[1]{0}', space=sflag, size = 0x4, scoped, tag = 'scoped memory for tpu_custom_call.1']
    #allocation10 [shape = 'u8[8192]{0}', space=vmem, size = 0x2000, scoped, tag = 'output window, operand 2, single buffered']
    %16 = vsyncpa [#allocation3], 0
    %17 = vsyncpa [#allocation6], 0
    %18 = vsyncpa [#allocation4], 0
    %19 = vsyncpa [#allocation9], 0
    // Predicated region
    $region2: #{tpu_custom_call.1} parent=1 // pred_check
      _
    $region3: #{tpu_custom_call.1} parent=1 // pred_check_branch
      %21 = sbr.rel (0) target = $region5
    $region4: #{tpu_custom_call.1} parent=1 // pred_region
      _
    $region5: #{tpu_custom_call.1} parent=1 // pred_fallthru
      _
    // Predicated region
    $region6: #{tpu_custom_call.1} parent=1 // pred_check
      _
    $region7: #{tpu_custom_call.1} parent=1 // pred_check_branch
      %23 = sbr.rel (0) target = $region9
    $region8: #{tpu_custom_call.1} parent=1 // pred_region
      _
    $region9: #{tpu_custom_call.1} parent=1 // pred_fallthru
      _
    // Predicated region
    $region10: #{tpu_custom_call.1} parent=1 // pred_check
      _
    $region11: #{tpu_custom_call.1} parent=1 // pred_check_branch
      %25 = sbr.rel (0) target = $region13
    $region12: #{tpu_custom_call.1} parent=1 // pred_region
      %s27 = ssub.s32 512, 512
      %28 = vsyncadd [#allocation3], %s27
      %s29 = sshll.u32 [#allocation2], 4
      %s30 = int_to_ptr.vmem [resolvable:$true] %s29
      %35 = dma.hbm_to_vmem [thread:$0]  %s2, 512, %s30, [#allocation3], 128, 128, 8
    $region13: #{tpu_custom_call.1} parent=1 // pred_fallthru
      _
    // Predicated region
    $region14: #{tpu_custom_call.1} parent=1 // pred_check
      _
    $region15: #{tpu_custom_call.1} parent=1 // pred_check_branch
      %37 = sbr.rel (0) target = $region17
    $region16: #{tpu_custom_call.1} parent=1 // pred_region
      _
    $region17: #{tpu_custom_call.1} parent=1 // pred_fallthru
      _
    // Predicated region
    $region18: #{tpu_custom_call.1} parent=1 // pred_check
      _
    $region19: #{tpu_custom_call.1} parent=1 // pred_check_branch
      %39 = sbr.rel (0) target = $region21
    $region20: #{tpu_custom_call.1} parent=1 // pred_region
      _
    $region21: #{tpu_custom_call.1} parent=1 // pred_fallthru
      _
    // Predicated region
    $region22: #{tpu_custom_call.1} parent=1 // pred_check
      _
    $region23: #{tpu_custom_call.1} parent=1 // pred_check_branch
      %41 = sbr.rel (0) target = $region25
    $region24: #{tpu_custom_call.1} parent=1 // pred_region
      _
    $region25: #{tpu_custom_call.1} parent=1 // pred_fallthru
      _
    // Predicated region
    $region26: #{tpu_custom_call.1} parent=1 // pred_check
      _
    $region27: #{tpu_custom_call.1} parent=1 // pred_check_branch
      %43 = sbr.rel (0) target = $region29
    $region28: #{tpu_custom_call.1} parent=1 // pred_region
      %s45 = ssub.s32 512, 512
      %46 = vsyncadd [#allocation6], %s45
      %s47 = sshll.u32 [#allocation5], 4
      %s48 = int_to_ptr.vmem [resolvable:$true] %s47
      %53 = dma.hbm_to_vmem [thread:$0]  %s6, 512, %s48, [#allocation6], 128, 128, 8
    $region29: #{tpu_custom_call.1} parent=1 // pred_fallthru
      _
    // Predicated region
    $region30: #{tpu_custom_call.1} parent=1 // pred_check
      _
    $region31: #{tpu_custom_call.1} parent=1 // pred_check_branch
      %55 = sbr.rel (0) target = $region33
    $region32: #{tpu_custom_call.1} parent=1 // pred_region
      _
    $region33: #{tpu_custom_call.1} parent=1 // pred_fallthru
      _
    // Predicated region
    $region34: #{tpu_custom_call.1} parent=1 // pred_check
      _
    $region35: #{tpu_custom_call.1} parent=1 // pred_check_branch
      %57 = sbr.rel (0) target = $region37
    $region36: #{tpu_custom_call.1} parent=1 // pred_region
      %58 = dma.done [#allocation3], 512
    $region37: #{tpu_custom_call.1} parent=1 // pred_fallthru
      _
    // Predicated region
    $region38: #{tpu_custom_call.1} parent=1 // pred_check
      _
    $region39: #{tpu_custom_call.1} parent=1 // pred_check_branch
      %60 = sbr.rel (0) target = $region41
    $region40: #{tpu_custom_call.1} parent=1 // pred_region
      %61 = dma.done [#allocation6], 512
    $region41: #{tpu_custom_call.1} parent=1 // pred_fallthru
      _
    %v62 = vld [vmem:[%s0] sm:$0xff]
    %v63 = vld [vmem:[%s0 + $0x8] sm:$0xff]
    %v64 = vld [vmem:[%s0 + $0x10] sm:$0xff]
    %v65 = vld [vmem:[%s0 + $0x18] sm:$0xff]
    %v66 = vld [vmem:[%s0 + $0x20] sm:$0xff]
    %v67 = vld [vmem:[%s0 + $0x28] sm:$0xff]
    %v68 = vld [vmem:[%s0 + $0x30] sm:$0xff]
    %v69 = vld [vmem:[%s0 + $0x38] sm:$0xff]
    %v70 = vld [vmem:[%s1] sm:$0xff]
    %v71 = vld [vmem:[%s1 + $0x8] sm:$0xff]
    %v72 = vld [vmem:[%s3] sm:$0x1]
    %v74 = vlaneseq
    %v75 = vshrl.u32 %v74, 7
    %v76 = vsub.s32 0, %v75
    %v77 = vrot.slane %v72, %v76
    %vm79 = vcmask 130048
    %v81 = vsel %vm79, %v62, 0
    %v84 = vsel %vm79, %v63, 0
    %v87 = vsel %vm79, %v64, 0
    %v90 = vsel %vm79, %v65, 0
    %v93 = vsel %vm79, %v66, 0
    %v96 = vsel %vm79, %v67, 0
    %v99 = vsel %vm79, %v68, 0
    %v102 = vsel %vm79, %v69, 0
    %104 = vmatprep.subr.mxu0 0.0
    %105 = vmatpush1.msra.mxu0 0.0
    %106 = vmatprep.subr.mxu0 0.0
    %107 = vmatpush1.msra.mxu0 0.0
    %108 = vmatprep.subr.mxu0 0.0
    %109 = vmatpush1.msra.mxu0 0.0
    %110 = vmatprep.subr.mxu0 0.0
    %111 = vmatpush1.msra.mxu0 0.0
    %112 = vmatprep.subr.mxu0 0.0
    %113 = vmatpush1.msra.mxu0 0.0
    %114 = vmatprep.subr.mxu0 0.0
    %115 = vmatpush1.msra.mxu0 0.0
    %116 = vmatprep.subr.mxu0 0.0
    %117 = vmatpush1.msra.mxu0 0.0
    %118 = vmatprep.subr.mxu0 0.0
    %119 = vmatpush1.msra.mxu0 0.0
    %120 = vmatprep.subr.mxu0 0.0
    %121 = vmatpush1.msra.mxu0 0.0
    %122 = vmatprep.subr.mxu0 0.0
    %123 = vmatpush1.msra.mxu0 0.0
    %124 = vmatprep.subr.mxu0 0.0
    %125 = vmatpush1.msra.mxu0 0.0
    %126 = vmatprep.subr.mxu0 0.0
    %127 = vmatpush1.msra.mxu0 0.0
    %128 = vmatprep.subr.mxu0 0.0
    %129 = vmatpush1.msra.mxu0 0.0
    %130 = vmatprep.subr.mxu0 0.0
    %131 = vmatpush1.msra.mxu0 0.0
    %132 = vmatprep.subr.mxu0 0.0
    %133 = vmatpush1.msra.mxu0 %v71
    %134 = vmatprep.subr.mxu0 0.0
    %135 = vmatpush1.msra.mxu0 %v70
    %136 = vmatprep.subr.mxu0 0.0
    %137 = vmatpush2.msra.mxu0 0.0
    %138 = vmatprep.subr.mxu0 0.0
    %139 = vmatpush2.msra.mxu0 0.0
    %140 = vmatprep.subr.mxu0 0.0
    %141 = vmatpush2.msra.mxu0 0.0
    %142 = vmatprep.subr.mxu0 0.0
    %143 = vmatpush2.msra.mxu0 0.0
    %144 = vmatprep.subr.mxu0 0.0
    %145 = vmatpush2.msra.mxu0 0.0
    %146 = vmatprep.subr.mxu0 0.0
    %147 = vmatpush2.msra.mxu0 0.0
    %148 = vmatprep.subr.mxu0 0.0
    %149 = vmatpush2.msra.mxu0 0.0
    %150 = vmatprep.subr.mxu0 0.0
    %151 = vmatpush2.msra.mxu0 0.0
    %152 = vmatprep.subr.mxu0 0.0
    %153 = vmatpush2.msra.mxu0 0.0
    %154 = vmatprep.subr.mxu0 0.0
    %155 = vmatpush2.msra.mxu0 0.0
    %156 = vmatprep.subr.mxu0 0.0
    %157 = vmatpush2.msra.mxu0 0.0
    %158 = vmatprep.subr.mxu0 0.0
    %159 = vmatpush2.msra.mxu0 0.0
    %160 = vmatprep.subr.mxu0 0.0
    %161 = vmatpush2.msra.mxu0 0.0
    %162 = vmatprep.subr.mxu0 0.0
    %163 = vmatpush2.msra.mxu0 0.0
    %164 = vmatprep.subr.mxu0 0.0
    %165 = vmatpush2.msra.mxu0 0.0
    %166 = vmatprep.subr.mxu0 0.0
    %167 = vmatpush2.msra.mxu0 0.0
    %168 = vmatprep.mubr.f32.mxu0 0.0
    %169 = vmatmul.mubr.f32.gmra.mxu0 %v81
    %v170 = vpop.f32.mrf.mxu0
    %v171 = vadd.f32 %v77, %v170
    %v172 = vpop.f32.mrf.mxu0
    %173 = vmatprep.mubr.f32.mxu0 0.0
    %174 = vmatmul.mubr.f32.gmra.mxu0 %v84
    %v175 = vpop.f32.mrf.mxu0
    %v176 = vadd.f32 %v77, %v175
    %v177 = vpop.f32.mrf.mxu0
    %178 = vmatprep.mubr.f32.mxu0 0.0
    %179 = vmatmul.mubr.f32.gmra.mxu0 %v87
    %v180 = vpop.f32.mrf.mxu0
    %v181 = vadd.f32 %v77, %v180
    %v182 = vpop.f32.mrf.mxu0
    %183 = vmatprep.mubr.f32.mxu0 0.0
    %184 = vmatmul.mubr.f32.gmra.mxu0 %v90
    %v185 = vpop.f32.mrf.mxu0
    %v186 = vadd.f32 %v77, %v185
    %v187 = vpop.f32.mrf.mxu0
    %188 = vmatprep.mubr.f32.mxu0 0.0
    %189 = vmatmul.mubr.f32.gmra.mxu0 %v93
    %v190 = vpop.f32.mrf.mxu0
    %v191 = vadd.f32 %v77, %v190
    %v192 = vpop.f32.mrf.mxu0
    %193 = vmatprep.mubr.f32.mxu0 0.0
    %194 = vmatmul.mubr.f32.gmra.mxu0 %v96
    %v195 = vpop.f32.mrf.mxu0
    %v196 = vadd.f32 %v77, %v195
    %v197 = vpop.f32.mrf.mxu0
    %198 = vmatprep.mubr.f32.mxu0 0.0
    %199 = vmatmul.mubr.f32.gmra.mxu0 %v99
    %v200 = vpop.f32.mrf.mxu0
    %v201 = vadd.f32 %v77, %v200
    %v202 = vpop.f32.mrf.mxu0
    %203 = vmatprep.mubr.f32.mxu0 0.0
    %204 = vmatmul.mubr.f32.gmra.mxu0 %v102
    %v205 = vpop.f32.mrf.mxu0
    %v206 = vadd.f32 %v77, %v205
    %v207 = vpop.f32.mrf.mxu0
    %208 = vdwg.mxu0
    %v209 = vld [vmem:[#allocation2] sm:$0xff]
    %v210 = vld [vmem:[#allocation2 + $0x8] sm:$0xff]
    %v211 = vld [vmem:[#allocation2 + $0x10] sm:$0xff]
    %v212 = vld [vmem:[#allocation2 + $0x18] sm:$0xff]
    %v213 = vld [vmem:[%s4] sm:$0xff]
    %v214 = vld [vmem:[%s4 + $0x8] sm:$0xff]
    %v215 = vld [vmem:[%s4 + $0x10] sm:$0xff]
    %v216 = vld [vmem:[%s4 + $0x18] sm:$0xff]
    %v217 = vld [vmem:[%s4 + $0x20] sm:$0xff]
    %v218 = vld [vmem:[%s4 + $0x28] sm:$0xff]
    %v219 = vld [vmem:[%s4 + $0x30] sm:$0xff]
    %v220 = vld [vmem:[%s4 + $0x38] sm:$0xff]
    %v221 = vld [vmem:[%s5] sm:$0x1]
    %vm222 = vcmask 261120
    %v224 = vsel %vm222, 0.0, 0
    %226 = vmatprep.subr.mxu0 0.0
    %227 = vmatpush1.msra.mxu0 0.0
    %228 = vmatprep.subr.mxu0 0.0
    %229 = vmatpush1.msra.mxu0 0.0
    %230 = vmatprep.subr.mxu0 0.0
    %231 = vmatpush1.msra.mxu0 0.0
    %232 = vmatprep.subr.mxu0 0.0
    %233 = vmatpush1.msra.mxu0 0.0
    %234 = vmatprep.subr.mxu0 0.0
    %235 = vmatpush1.msra.mxu0 0.0
    %236 = vmatprep.subr.mxu0 0.0
    %237 = vmatpush1.msra.mxu0 0.0
    %238 = vmatprep.subr.mxu0 0.0
    %239 = vmatpush1.msra.mxu0 0.0
    %240 = vmatprep.subr.mxu0 0.0
    %241 = vmatpush1.msra.mxu0 0.0
    %242 = vmatprep.subr.mxu0 0.0
    %243 = vmatpush1.msra.mxu0 0.0
    %244 = vmatprep.subr.mxu0 0.0
    %245 = vmatpush1.msra.mxu0 0.0
    %246 = vmatprep.subr.mxu0 0.0
    %247 = vmatpush1.msra.mxu0 0.0
    %248 = vmatprep.subr.mxu0 0.0
    %249 = vmatpush1.msra.mxu0 0.0
    %250 = vmatprep.subr.mxu0 0.0
    %251 = vmatpush1.msra.mxu0 %v212
    %252 = vmatprep.subr.mxu0 0.0
    %253 = vmatpush1.msra.mxu0 %v211
    %254 = vmatprep.subr.mxu0 0.0
    %255 = vmatpush1.msra.mxu0 %v210
    %256 = vmatprep.subr.mxu0 0.0
    %257 = vmatpush1.msra.mxu0 %v209
    %258 = vmatprep.subr.mxu0 0.0
    %259 = vmatpush2.msra.mxu0 0.0
    %260 = vmatprep.subr.mxu0 0.0
    %261 = vmatpush2.msra.mxu0 0.0
    %262 = vmatprep.subr.mxu0 0.0
    %263 = vmatpush2.msra.mxu0 0.0
    %264 = vmatprep.subr.mxu0 0.0
    %265 = vmatpush2.msra.mxu0 0.0
    %266 = vmatprep.subr.mxu0 0.0
    %267 = vmatpush2.msra.mxu0 0.0
    %268 = vmatprep.subr.mxu0 0.0
    %269 = vmatpush2.msra.mxu0 0.0
    %270 = vmatprep.subr.mxu0 0.0
    %271 = vmatpush2.msra.mxu0 0.0
    %272 = vmatprep.subr.mxu0 0.0
    %273 = vmatpush2.msra.mxu0 0.0
    %274 = vmatprep.subr.mxu0 0.0
    %275 = vmatpush2.msra.mxu0 0.0
    %276 = vmatprep.subr.mxu0 0.0
    %277 = vmatpush2.msra.mxu0 0.0
    %278 = vmatprep.subr.mxu0 0.0
    %279 = vmatpush2.msra.mxu0 0.0
    %280 = vmatprep.subr.mxu0 0.0
    %281 = vmatpush2.msra.mxu0 0.0
    %282 = vmatprep.subr.mxu0 0.0
    %283 = vmatpush2.msra.mxu0 0.0
    %284 = vmatprep.subr.mxu0 0.0
    %285 = vmatpush2.msra.mxu0 0.0
    %286 = vmatprep.subr.mxu0 0.0
    %287 = vmatpush2.msra.mxu0 0.0
    %288 = vmatprep.subr.mxu0 0.0
    %289 = vmatpush2.msra.mxu0 0.0
    %290 = vmatprep.mubr.f32.mxu0 0.0
    %291 = vmatmul.mubr.f32.gmra.mxu0 %v224
    %v292 = vpop.f32.mrf.mxu0
    %v293 = vadd.f32 0.0, %v292
    %v294 = vpop.f32.mrf.mxu0
    %295 = vdwg.mxu0
    %v296 = vadd.f32 %v171, %v293
    %v297 = vxor.u32 %v296, 2147483648
    %v298 = vmul.f32 %v297, 1.442695
    %v299 = vpow.pop %v298
    %v300 = vadd.f32 %v299, 1.0
    %v301 = vrcp.pop %v300
    %v302 = vmul.f32 1.0, %v301
    %v303 = vtanh.pop %v296
    %v304 = vmul.f32 %v302, 0.0
    %306 = vrot.lane.b32.xlu0 %v303, 64
    %v307 = vpop.permute.xlu0 %306
    %v309 = vmul.f32 %v302, %v307
    %311 = vrot.lane.b32.xlu0 %v309, 32
    %v312 = vpop.permute.xlu0 %311
    %v314 = vadd.f32 %v304, %v312
    %v315 = vtanh.pop %v314
    %317 = vrot.lane.b32.xlu0 %v315, 64
    %v318 = vpop.permute.xlu0 %317
    %v320 = vmul.f32 %v302, %v318
    %322 = vrot.lane.b32.xlu0 %v320, 32
    %v323 = vpop.permute.xlu0 %322
    %v325 = vsel %vm222, %v323, 0.0
    %v327 = vlaneseq
    %v328 = vshrl.u32 %v327, 7
    %v329 = vsub.s32 0, %v328
    %v330 = vrot.slane %v221, %v329
    %vm332 = vcmask 523264
    %v334 = vsel %vm332, %v325, 0
    %336 = vmatprep.subr.mxu0 0.0
    %337 = vmatpush1.msra.mxu0 0.0
    %338 = vmatprep.subr.mxu0 0.0
    %339 = vmatpush1.msra.mxu0 0.0
    %340 = vmatprep.subr.mxu0 0.0
    %341 = vmatpush1.msra.mxu0 0.0
    %342 = vmatprep.subr.mxu0 0.0
    %343 = vmatpush1.msra.mxu0 0.0
    %344 = vmatprep.subr.mxu0 0.0
    %345 = vmatpush1.msra.mxu0 0.0
    %346 = vmatprep.subr.mxu0 0.0
    %347 = vmatpush1.msra.mxu0 0.0
    %348 = vmatprep.subr.mxu0 0.0
    %349 = vmatpush1.msra.mxu0 0.0
    %350 = vmatprep.subr.mxu0 0.0
    %351 = vmatpush1.msra.mxu0 0.0
    %352 = vmatprep.subr.mxu0 0.0
    %353 = vmatpush1.msra.mxu0 %v220
    %354 = vmatprep.subr.mxu0 0.0
    %355 = vmatpush1.msra.mxu0 %v219
    %356 = vmatprep.subr.mxu0 0.0
    %357 = vmatpush1.msra.mxu0 %v218
    %358 = vmatprep.subr.mxu0 0.0
    %359 = vmatpush1.msra.mxu0 %v217
    %360 = vmatprep.subr.mxu0 0.0
    %361 = vmatpush1.msra.mxu0 %v216
    %362 = vmatprep.subr.mxu0 0.0
    %363 = vmatpush1.msra.mxu0 %v215
    %364 = vmatprep.subr.mxu0 0.0
    %365 = vmatpush1.msra.mxu0 %v214
    %366 = vmatprep.subr.mxu0 0.0
    %367 = vmatpush1.msra.mxu0 %v213
    %368 = vmatprep.subr.mxu0 0.0
    %369 = vmatpush2.msra.mxu0 0.0
    %370 = vmatprep.subr.mxu0 0.0
    %371 = vmatpush2.msra.mxu0 0.0
    %372 = vmatprep.subr.mxu0 0.0
    %373 = vmatpush2.msra.mxu0 0.0
    %374 = vmatprep.subr.mxu0 0.0
    %375 = vmatpush2.msra.mxu0 0.0
    %376 = vmatprep.subr.mxu0 0.0
    %377 = vmatpush2.msra.mxu0 0.0
    %378 = vmatprep.subr.mxu0 0.0
    %379 = vmatpush2.msra.mxu0 0.0
    %380 = vmatprep.subr.mxu0 0.0
    %381 = vmatpush2.msra.mxu0 0.0
    %382 = vmatprep.subr.mxu0 0.0
    %383 = vmatpush2.msra.mxu0 0.0
    %384 = vmatprep.subr.mxu0 0.0
    %385 = vmatpush2.msra.mxu0 0.0
    %386 = vmatprep.subr.mxu0 0.0
    %387 = vmatpush2.msra.mxu0 0.0
    %388 = vmatprep.subr.mxu0 0.0
    %389 = vmatpush2.msra.mxu0 0.0
    %390 = vmatprep.subr.mxu0 0.0
    %391 = vmatpush2.msra.mxu0 0.0
    %392 = vmatprep.subr.mxu0 0.0
    %393 = vmatpush2.msra.mxu0 0.0
    %394 = vmatprep.subr.mxu0 0.0
    %395 = vmatpush2.msra.mxu0 0.0
    %396 = vmatprep.subr.mxu0 0.0
    %397 = vmatpush2.msra.mxu0 0.0
    %398 = vmatprep.subr.mxu0 0.0
    %399 = vmatpush2.msra.mxu0 0.0
    %400 = vmatprep.mubr.f32.mxu0 0.0
    %401 = vmatmul.mubr.f32.gmra.mxu0 %v334
    %v402 = vpop.f32.mrf.mxu0
    %v403 = vadd.f32 %v330, %v402
    %v404 = vpop.f32.mrf.mxu0
    %405 = vdwg.mxu0
    %v406 = vxor.u32 %v403, 2147483648
    %v407 = vmul.f32 %v406, 1.442695
    %v408 = vpow.pop %v407
    %v409 = vadd.f32 %v408, 1.0
    %v410 = vrcp.pop %v409
    %v411 = vmul.f32 1.0, %v410
    %v412 = vtanh.pop %v403
    %v413 = vmul.f32 %v411, 0.0
    %415 = vrot.lane.b32.xlu0 %v412, 64
    %v416 = vpop.permute.xlu0 %415
    %v418 = vmul.f32 %v411, %v416
    %420 = vrot.lane.b32.xlu0 %v418, 32
    %v421 = vpop.permute.xlu0 %420
    %v423 = vadd.f32 %v413, %v421
    %v424 = vtanh.pop %v423
    %426 = vrot.lane.b32.xlu0 %v424, 64
    %v427 = vpop.permute.xlu0 %426
    %v429 = vmul.f32 %v411, %v427
    %v430 = vsel %vm222, %v323, 0
    %432 = vmatprep.subr.mxu0 0.0
    %433 = vmatpush1.msra.mxu0 0.0
    %434 = vmatprep.subr.mxu0 0.0
    %435 = vmatpush1.msra.mxu0 0.0
    %436 = vmatprep.subr.mxu0 0.0
    %437 = vmatpush1.msra.mxu0 0.0
    %438 = vmatprep.subr.mxu0 0.0
    %439 = vmatpush1.msra.mxu0 0.0
    %440 = vmatprep.subr.mxu0 0.0
    %441 = vmatpush1.msra.mxu0 0.0
    %442 = vmatprep.subr.mxu0 0.0
    %443 = vmatpush1.msra.mxu0 0.0
    %444 = vmatprep.subr.mxu0 0.0
    %445 = vmatpush1.msra.mxu0 0.0
    %446 = vmatprep.subr.mxu0 0.0
    %447 = vmatpush1.msra.mxu0 0.0
    %448 = vmatprep.subr.mxu0 0.0
    %449 = vmatpush1.msra.mxu0 0.0
    %450 = vmatprep.subr.mxu0 0.0
    %451 = vmatpush1.msra.mxu0 0.0
    %452 = vmatprep.subr.mxu0 0.0
    %453 = vmatpush1.msra.mxu0 0.0
    %454 = vmatprep.subr.mxu0 0.0
    %455 = vmatpush1.msra.mxu0 0.0
    %456 = vmatprep.subr.mxu0 0.0
    %457 = vmatpush1.msra.mxu0 %v212
    %458 = vmatprep.subr.mxu0 0.0
    %459 = vmatpush1.msra.mxu0 %v211
    %460 = vmatprep.subr.mxu0 0.0
    %461 = vmatpush1.msra.mxu0 %v210
    %462 = vmatprep.subr.mxu0 0.0
    %463 = vmatpush1.msra.mxu0 %v209
    %464 = vmatprep.subr.mxu0 0.0
    %465 = vmatpush2.msra.mxu0 0.0
    %466 = vmatprep.subr.mxu0 0.0
    %467 = vmatpush2.msra.mxu0 0.0
    %468 = vmatprep.subr.mxu0 0.0
    %469 = vmatpush2.msra.mxu0 0.0
    %470 = vmatprep.subr.mxu0 0.0
    %471 = vmatpush2.msra.mxu0 0.0
    %472 = vmatprep.subr.mxu0 0.0
    %473 = vmatpush2.msra.mxu0 0.0
    %474 = vmatprep.subr.mxu0 0.0
    %475 = vmatpush2.msra.mxu0 0.0
    %476 = vmatprep.subr.mxu0 0.0
    %477 = vmatpush2.msra.mxu0 0.0
    %478 = vmatprep.subr.mxu0 0.0
    %479 = vmatpush2.msra.mxu0 0.0
    %480 = vmatprep.subr.mxu0 0.0
    %481 = vmatpush2.msra.mxu0 0.0
    %482 = vmatprep.subr.mxu0 0.0
    %483 = vmatpush2.msra.mxu0 0.0
    %484 = vmatprep.subr.mxu0 0.0
    %485 = vmatpush2.msra.mxu0 0.0
    %486 = vmatprep.subr.mxu0 0.0
    %487 = vmatpush2.msra.mxu0 0.0
    %488 = vmatprep.subr.mxu0 0.0
    %489 = vmatpush2.msra.mxu0 0.0
    %490 = vmatprep.subr.mxu0 0.0
    %491 = vmatpush2.msra.mxu0 0.0
    %492 = vmatprep.subr.mxu0 0.0
    %493 = vmatpush2.msra.mxu0 0.0
    %494 = vmatprep.subr.mxu0 0.0
    %495 = vmatpush2.msra.mxu0 0.0
    %496 = vmatprep.mubr.f32.mxu0 0.0
    %497 = vmatmul.mubr.f32.gmra.mxu0 %v430
    %v498 = vpop.f32.mrf.mxu0
    %v499 = vadd.f32 0.0, %v498
    %v500 = vpop.f32.mrf.mxu0
    %501 = vdwg.mxu0
    %v502 = vadd.f32 %v176, %v499
    %v503 = vxor.u32 %v502, 2147483648
    %v504 = vmul.f32 %v503, 1.442695
    %v505 = vpow.pop %v504
    %v506 = vadd.f32 %v505, 1.0
    %v507 = vrcp.pop %v506
    %v508 = vmul.f32 1.0, %v507
    %v509 = vtanh.pop %v502
    %v510 = vmul.f32 %v508, %v314
    %512 = vrot.lane.b32.xlu0 %v509, 64
    %v513 = vpop.permute.xlu0 %512
    %v515 = vmul.f32 %v508, %v513
    %517 = vrot.lane.b32.xlu0 %v515, 32
    %v518 = vpop.permute.xlu0 %517
    %v520 = vadd.f32 %v510, %v518
    %v521 = vtanh.pop %v520
    %523 = vrot.lane.b32.xlu0 %v521, 64
    %v524 = vpop.permute.xlu0 %523
    %v526 = vmul.f32 %v508, %v524
    %528 = vrot.lane.b32.xlu0 %v526, 32
    %v529 = vpop.permute.xlu0 %528
    %532 = vrot.lane.b32.xlu0 %v429, 64
    %v533 = vpop.permute.xlu0 %532
    %v535 = vsel %vm222, %v529, %v533
    %v537 = vsel %vm332, %v535, 0
    %539 = vmatprep.subr.mxu0 0.0
    %540 = vmatpush1.msra.mxu0 0.0
    %541 = vmatprep.subr.mxu0 0.0
    %542 = vmatpush1.msra.mxu0 0.0
    %543 = vmatprep.subr.mxu0 0.0
    %544 = vmatpush1.msra.mxu0 0.0
    %545 = vmatprep.subr.mxu0 0.0
    %546 = vmatpush1.msra.mxu0 0.0
    %547 = vmatprep.subr.mxu0 0.0
    %548 = vmatpush1.msra.mxu0 0.0
    %549 = vmatprep.subr.mxu0 0.0
    %550 = vmatpush1.msra.mxu0 0.0
    %551 = vmatprep.subr.mxu0 0.0
    %552 = vmatpush1.msra.mxu0 0.0
    %553 = vmatprep.subr.mxu0 0.0
    %554 = vmatpush1.msra.mxu0 0.0
    %555 = vmatprep.subr.mxu0 0.0
    %556 = vmatpush1.msra.mxu0 %v220
    %557 = vmatprep.subr.mxu0 0.0
    %558 = vmatpush1.msra.mxu0 %v219
    %559 = vmatprep.subr.mxu0 0.0
    %560 = vmatpush1.msra.mxu0 %v218
    %561 = vmatprep.subr.mxu0 0.0
    %562 = vmatpush1.msra.mxu0 %v217
    %563 = vmatprep.subr.mxu0 0.0
    %564 = vmatpush1.msra.mxu0 %v216
    %565 = vmatprep.subr.mxu0 0.0
    %566 = vmatpush1.msra.mxu0 %v215
    %567 = vmatprep.subr.mxu0 0.0
    %568 = vmatpush1.msra.mxu0 %v214
    %569 = vmatprep.subr.mxu0 0.0
    %570 = vmatpush1.msra.mxu0 %v213
    %571 = vmatprep.subr.mxu0 0.0
    %572 = vmatpush2.msra.mxu0 0.0
    %573 = vmatprep.subr.mxu0 0.0
    %574 = vmatpush2.msra.mxu0 0.0
    %575 = vmatprep.subr.mxu0 0.0
    %576 = vmatpush2.msra.mxu0 0.0
    %577 = vmatprep.subr.mxu0 0.0
    %578 = vmatpush2.msra.mxu0 0.0
    %579 = vmatprep.subr.mxu0 0.0
    %580 = vmatpush2.msra.mxu0 0.0
    %581 = vmatprep.subr.mxu0 0.0
    %582 = vmatpush2.msra.mxu0 0.0
    %583 = vmatprep.subr.mxu0 0.0
    %584 = vmatpush2.msra.mxu0 0.0
    %585 = vmatprep.subr.mxu0 0.0
    %586 = vmatpush2.msra.mxu0 0.0
    %587 = vmatprep.subr.mxu0 0.0
    %588 = vmatpush2.msra.mxu0 0.0
    %589 = vmatprep.subr.mxu0 0.0
    %590 = vmatpush2.msra.mxu0 0.0
    %591 = vmatprep.subr.mxu0 0.0
    %592 = vmatpush2.msra.mxu0 0.0
    %593 = vmatprep.subr.mxu0 0.0
    %594 = vmatpush2.msra.mxu0 0.0
    %595 = vmatprep.subr.mxu0 0.0
    %596 = vmatpush2.msra.mxu0 0.0
    %597 = vmatprep.subr.mxu0 0.0
    %598 = vmatpush2.msra.mxu0 0.0
    %599 = vmatprep.subr.mxu0 0.0
    %600 = vmatpush2.msra.mxu0 0.0
    %601 = vmatprep.subr.mxu0 0.0
    %602 = vmatpush2.msra.mxu0 0.0
    %603 = vmatprep.mubr.f32.mxu0 0.0
    %604 = vmatmul.mubr.f32.gmra.mxu0 %v537
    %v605 = vpop.f32.mrf.mxu0
    %v606 = vadd.f32 %v330, %v605
    %v607 = vpop.f32.mrf.mxu0
    %608 = vdwg.mxu0
    %v609 = vxor.u32 %v606, 2147483648
    %v610 = vmul.f32 %v609, 1.442695
    %v611 = vpow.pop %v610
    %v612 = vadd.f32 %v611, 1.0
    %v613 = vrcp.pop %v612
    %v614 = vmul.f32 1.0, %v613
    %v615 = vtanh.pop %v606
    %v616 = vmul.f32 %v614, %v423
    %618 = vrot.lane.b32.xlu0 %v615, 64
    %v619 = vpop.permute.xlu0 %618
    %v621 = vmul.f32 %v614, %v619
    %623 = vrot.lane.b32.xlu0 %v621, 32
    %v624 = vpop.permute.xlu0 %623
    %v626 = vadd.f32 %v616, %v624
    %v627 = vtanh.pop %v626
    %629 = vrot.lane.b32.xlu0 %v627, 64
    %v630 = vpop.permute.xlu0 %629
    %v632 = vmul.f32 %v614, %v630
    %v633 = vsel %vm222, %v529, 0
    %635 = vmatprep.subr.mxu0 0.0
    %636 = vmatpush1.msra.mxu0 0.0
    %637 = vmatprep.subr.mxu0 0.0
    %638 = vmatpush1.msra.mxu0 0.0
    %639 = vmatprep.subr.mxu0 0.0
    %640 = vmatpush1.msra.mxu0 0.0
    %641 = vmatprep.subr.mxu0 0.0
    %642 = vmatpush1.msra.mxu0 0.0
    %643 = vmatprep.subr.mxu0 0.0
    %644 = vmatpush1.msra.mxu0 0.0
    %645 = vmatprep.subr.mxu0 0.0
    %646 = vmatpush1.msra.mxu0 0.0
    %647 = vmatprep.subr.mxu0 0.0
    %648 = vmatpush1.msra.mxu0 0.0
    %649 = vmatprep.subr.mxu0 0.0
    %650 = vmatpush1.msra.mxu0 0.0
    %651 = vmatprep.subr.mxu0 0.0
    %652 = vmatpush1.msra.mxu0 0.0
    %653 = vmatprep.subr.mxu0 0.0
    %654 = vmatpush1.msra.mxu0 0.0
    %655 = vmatprep.subr.mxu0 0.0
    %656 = vmatpush1.msra.mxu0 0.0
    %657 = vmatprep.subr.mxu0 0.0
    %658 = vmatpush1.msra.mxu0 0.0
    %659 = vmatprep.subr.mxu0 0.0
    %660 = vmatpush1.msra.mxu0 %v212
    %661 = vmatprep.subr.mxu0 0.0
    %662 = vmatpush1.msra.mxu0 %v211
    %663 = vmatprep.subr.mxu0 0.0
    %664 = vmatpush1.msra.mxu0 %v210
    %665 = vmatprep.subr.mxu0 0.0
    %666 = vmatpush1.msra.mxu0 %v209
    %667 = vmatprep.subr.mxu0 0.0
    %668 = vmatpush2.msra.mxu0 0.0
    %669 = vmatprep.subr.mxu0 0.0
    %670 = vmatpush2.msra.mxu0 0.0
    %671 = vmatprep.subr.mxu0 0.0
    %672 = vmatpush2.msra.mxu0 0.0
    %673 = vmatprep.subr.mxu0 0.0
    %674 = vmatpush2.msra.mxu0 0.0
    %675 = vmatprep.subr.mxu0 0.0
    %676 = vmatpush2.msra.mxu0 0.0
    %677 = vmatprep.subr.mxu0 0.0
    %678 = vmatpush2.msra.mxu0 0.0
    %679 = vmatprep.subr.mxu0 0.0
    %680 = vmatpush2.msra.mxu0 0.0
    %681 = vmatprep.subr.mxu0 0.0
    %682 = vmatpush2.msra.mxu0 0.0
    %683 = vmatprep.subr.mxu0 0.0
    %684 = vmatpush2.msra.mxu0 0.0
    %685 = vmatprep.subr.mxu0 0.0
    %686 = vmatpush2.msra.mxu0 0.0
    %687 = vmatprep.subr.mxu0 0.0
    %688 = vmatpush2.msra.mxu0 0.0
    %689 = vmatprep.subr.mxu0 0.0
    %690 = vmatpush2.msra.mxu0 0.0
    %691 = vmatprep.subr.mxu0 0.0
    %692 = vmatpush2.msra.mxu0 0.0
    %693 = vmatprep.subr.mxu0 0.0
    %694 = vmatpush2.msra.mxu0 0.0
    %695 = vmatprep.subr.mxu0 0.0
    %696 = vmatpush2.msra.mxu0 0.0
    %697 = vmatprep.subr.mxu0 0.0
    %698 = vmatpush2.msra.mxu0 0.0
    %699 = vmatprep.mubr.f32.mxu0 0.0
    %700 = vmatmul.mubr.f32.gmra.mxu0 %v633
    %v701 = vpop.f32.mrf.mxu0
    %v702 = vadd.f32 0.0, %v701
    %v703 = vpop.f32.mrf.mxu0
    %704 = vdwg.mxu0
    %v705 = vadd.f32 %v181, %v702
    %v706 = vxor.u32 %v705, 2147483648
    %v707 = vmul.f32 %v706, 1.442695
    %v708 = vpow.pop %v707
    %v709 = vadd.f32 %v708, 1.0
    %v710 = vrcp.pop %v709
    %v711 = vmul.f32 1.0, %v710
    %v712 = vtanh.pop %v705
    %v713 = vmul.f32 %v711, %v520
    %715 = vrot.lane.b32.xlu0 %v712, 64
    %v716 = vpop.permute.xlu0 %715
    %v718 = vmul.f32 %v711, %v716
    %720 = vrot.lane.b32.xlu0 %v718, 32
    %v721 = vpop.permute.xlu0 %720
    %v723 = vadd.f32 %v713, %v721
    %v724 = vtanh.pop %v723
    %726 = vrot.lane.b32.xlu0 %v724, 64
    %v727 = vpop.permute.xlu0 %726
    %v729 = vmul.f32 %v711, %v727
    %731 = vrot.lane.b32.xlu0 %v729, 32
    %v732 = vpop.permute.xlu0 %731
    %735 = vrot.lane.b32.xlu0 %v632, 64
    %v736 = vpop.permute.xlu0 %735
    %v738 = vsel %vm222, %v732, %v736
    %v740 = vsel %vm332, %v738, 0
    %742 = vmatprep.subr.mxu0 0.0
    %743 = vmatpush1.msra.mxu0 0.0
    %744 = vmatprep.subr.mxu0 0.0
    %745 = vmatpush1.msra.mxu0 0.0
    %746 = vmatprep.subr.mxu0 0.0
    %747 = vmatpush1.msra.mxu0 0.0
    %748 = vmatprep.subr.mxu0 0.0
    %749 = vmatpush1.msra.mxu0 0.0
    %750 = vmatprep.subr.mxu0 0.0
    %751 = vmatpush1.msra.mxu0 0.0
    %752 = vmatprep.subr.mxu0 0.0
    %753 = vmatpush1.msra.mxu0 0.0
    %754 = vmatprep.subr.mxu0 0.0
    %755 = vmatpush1.msra.mxu0 0.0
    %756 = vmatprep.subr.mxu0 0.0
    %757 = vmatpush1.msra.mxu0 0.0
    %758 = vmatprep.subr.mxu0 0.0
    %759 = vmatpush1.msra.mxu0 %v220
    %760 = vmatprep.subr.mxu0 0.0
    %761 = vmatpush1.msra.mxu0 %v219
    %762 = vmatprep.subr.mxu0 0.0
    %763 = vmatpush1.msra.mxu0 %v218
    %764 = vmatprep.subr.mxu0 0.0
    %765 = vmatpush1.msra.mxu0 %v217
    %766 = vmatprep.subr.mxu0 0.0
    %767 = vmatpush1.msra.mxu0 %v216
    %768 = vmatprep.subr.mxu0 0.0
    %769 = vmatpush1.msra.mxu0 %v215
    %770 = vmatprep.subr.mxu0 0.0
    %771 = vmatpush1.msra.mxu0 %v214
    %772 = vmatprep.subr.mxu0 0.0
    %773 = vmatpush1.msra.mxu0 %v213
    %774 = vmatprep.subr.mxu0 0.0
    %775 = vmatpush2.msra.mxu0 0.0
    %776 = vmatprep.subr.mxu0 0.0
    %777 = vmatpush2.msra.mxu0 0.0
    %778 = vmatprep.subr.mxu0 0.0
    %779 = vmatpush2.msra.mxu0 0.0
    %780 = vmatprep.subr.mxu0 0.0
    %781 = vmatpush2.msra.mxu0 0.0
    %782 = vmatprep.subr.mxu0 0.0
    %783 = vmatpush2.msra.mxu0 0.0
    %784 = vmatprep.subr.mxu0 0.0
    %785 = vmatpush2.msra.mxu0 0.0
    %786 = vmatprep.subr.mxu0 0.0
    %787 = vmatpush2.msra.mxu0 0.0
    %788 = vmatprep.subr.mxu0 0.0
    %789 = vmatpush2.msra.mxu0 0.0
    %790 = vmatprep.subr.mxu0 0.0
    %791 = vmatpush2.msra.mxu0 0.0
    %792 = vmatprep.subr.mxu0 0.0
    %793 = vmatpush2.msra.mxu0 0.0
    %794 = vmatprep.subr.mxu0 0.0
    %795 = vmatpush2.msra.mxu0 0.0
    %796 = vmatprep.subr.mxu0 0.0
    %797 = vmatpush2.msra.mxu0 0.0
    %798 = vmatprep.subr.mxu0 0.0
    %799 = vmatpush2.msra.mxu0 0.0
    %800 = vmatprep.subr.mxu0 0.0
    %801 = vmatpush2.msra.mxu0 0.0
    %802 = vmatprep.subr.mxu0 0.0
    %803 = vmatpush2.msra.mxu0 0.0
    %804 = vmatprep.subr.mxu0 0.0
    %805 = vmatpush2.msra.mxu0 0.0
    %806 = vmatprep.mubr.f32.mxu0 0.0
    %807 = vmatmul.mubr.f32.gmra.mxu0 %v740
    %v808 = vpop.f32.mrf.mxu0
    %v809 = vadd.f32 %v330, %v808
    %v810 = vpop.f32.mrf.mxu0
    %811 = vdwg.mxu0
    %v812 = vxor.u32 %v809, 2147483648
    %v813 = vmul.f32 %v812, 1.442695
    %v814 = vpow.pop %v813
    %v815 = vadd.f32 %v814, 1.0
    %v816 = vrcp.pop %v815
    %v817 = vmul.f32 1.0, %v816
    %v818 = vtanh.pop %v809
    %v819 = vmul.f32 %v817, %v626
    %821 = vrot.lane.b32.xlu0 %v818, 64
    %v822 = vpop.permute.xlu0 %821
    %v824 = vmul.f32 %v817, %v822
    %826 = vrot.lane.b32.xlu0 %v824, 32
    %v827 = vpop.permute.xlu0 %826
    %v829 = vadd.f32 %v819, %v827
    %v830 = vtanh.pop %v829
    %832 = vrot.lane.b32.xlu0 %v830, 64
    %v833 = vpop.permute.xlu0 %832
    %v835 = vmul.f32 %v817, %v833
    %v836 = vsel %vm222, %v732, 0
    %838 = vmatprep.subr.mxu0 0.0
    %839 = vmatpush1.msra.mxu0 0.0
    %840 = vmatprep.subr.mxu0 0.0
    %841 = vmatpush1.msra.mxu0 0.0
    %842 = vmatprep.subr.mxu0 0.0
    %843 = vmatpush1.msra.mxu0 0.0
    %844 = vmatprep.subr.mxu0 0.0
    %845 = vmatpush1.msra.mxu0 0.0
    %846 = vmatprep.subr.mxu0 0.0
    %847 = vmatpush1.msra.mxu0 0.0
    %848 = vmatprep.subr.mxu0 0.0
    %849 = vmatpush1.msra.mxu0 0.0
    %850 = vmatprep.subr.mxu0 0.0
    %851 = vmatpush1.msra.mxu0 0.0
    %852 = vmatprep.subr.mxu0 0.0
    %853 = vmatpush1.msra.mxu0 0.0
    %854 = vmatprep.subr.mxu0 0.0
    %855 = vmatpush1.msra.mxu0 0.0
    %856 = vmatprep.subr.mxu0 0.0
    %857 = vmatpush1.msra.mxu0 0.0
    %858 = vmatprep.subr.mxu0 0.0
    %859 = vmatpush1.msra.mxu0 0.0
    %860 = vmatprep.subr.mxu0 0.0
    %861 = vmatpush1.msra.mxu0 0.0
    %862 = vmatprep.subr.mxu0 0.0
    %863 = vmatpush1.msra.mxu0 %v212
    %864 = vmatprep.subr.mxu0 0.0
    %865 = vmatpush1.msra.mxu0 %v211
    %866 = vmatprep.subr.mxu0 0.0
    %867 = vmatpush1.msra.mxu0 %v210
    %868 = vmatprep.subr.mxu0 0.0
    %869 = vmatpush1.msra.mxu0 %v209
    %870 = vmatprep.subr.mxu0 0.0
    %871 = vmatpush2.msra.mxu0 0.0
    %872 = vmatprep.subr.mxu0 0.0
    %873 = vmatpush2.msra.mxu0 0.0
    %874 = vmatprep.subr.mxu0 0.0
    %875 = vmatpush2.msra.mxu0 0.0
    %876 = vmatprep.subr.mxu0 0.0
    %877 = vmatpush2.msra.mxu0 0.0
    %878 = vmatprep.subr.mxu0 0.0
    %879 = vmatpush2.msra.mxu0 0.0
    %880 = vmatprep.subr.mxu0 0.0
    %881 = vmatpush2.msra.mxu0 0.0
    %882 = vmatprep.subr.mxu0 0.0
    %883 = vmatpush2.msra.mxu0 0.0
    %884 = vmatprep.subr.mxu0 0.0
    %885 = vmatpush2.msra.mxu0 0.0
    %886 = vmatprep.subr.mxu0 0.0
    %887 = vmatpush2.msra.mxu0 0.0
    %888 = vmatprep.subr.mxu0 0.0
    %889 = vmatpush2.msra.mxu0 0.0
    %890 = vmatprep.subr.mxu0 0.0
    %891 = vmatpush2.msra.mxu0 0.0
    %892 = vmatprep.subr.mxu0 0.0
    %893 = vmatpush2.msra.mxu0 0.0
    %894 = vmatprep.subr.mxu0 0.0
    %895 = vmatpush2.msra.mxu0 0.0
    %896 = vmatprep.subr.mxu0 0.0
    %897 = vmatpush2.msra.mxu0 0.0
    %898 = vmatprep.subr.mxu0 0.0
    %899 = vmatpush2.msra.mxu0 0.0
    %900 = vmatprep.subr.mxu0 0.0
    %901 = vmatpush2.msra.mxu0 0.0
    %902 = vmatprep.mubr.f32.mxu0 0.0
    %903 = vmatmul.mubr.f32.gmra.mxu0 %v836
    %v904 = vpop.f32.mrf.mxu0
    %v905 = vadd.f32 0.0, %v904
    %v906 = vpop.f32.mrf.mxu0
    %907 = vdwg.mxu0
    %v908 = vadd.f32 %v186, %v905
    %v909 = vxor.u32 %v908, 2147483648
    %v910 = vmul.f32 %v909, 1.442695
    %v911 = vpow.pop %v910
    %v912 = vadd.f32 %v911, 1.0
    %v913 = vrcp.pop %v912
    %v914 = vmul.f32 1.0, %v913
    %v915 = vtanh.pop %v908
    %v916 = vmul.f32 %v914, %v723
    %918 = vrot.lane.b32.xlu0 %v915, 64
    %v919 = vpop.permute.xlu0 %918
    %v921 = vmul.f32 %v914, %v919
    %923 = vrot.lane.b32.xlu0 %v921, 32
    %v924 = vpop.permute.xlu0 %923
    %v926 = vadd.f32 %v916, %v924
    %v927 = vtanh.pop %v926
    %929 = vrot.lane.b32.xlu0 %v927, 64
    %v930 = vpop.permute.xlu0 %929
    %v932 = vmul.f32 %v914, %v930
    %934 = vrot.lane.b32.xlu0 %v932, 32
    %v935 = vpop.permute.xlu0 %934
    %938 = vrot.lane.b32.xlu0 %v835, 64
    %v939 = vpop.permute.xlu0 %938
    %v941 = vsel %vm222, %v935, %v939
    %v943 = vsel %vm332, %v941, 0
    %945 = vmatprep.subr.mxu0 0.0
    %946 = vmatpush1.msra.mxu0 0.0
    %947 = vmatprep.subr.mxu0 0.0
    %948 = vmatpush1.msra.mxu0 0.0
    %949 = vmatprep.subr.mxu0 0.0
    %950 = vmatpush1.msra.mxu0 0.0
    %951 = vmatprep.subr.mxu0 0.0
    %952 = vmatpush1.msra.mxu0 0.0
    %953 = vmatprep.subr.mxu0 0.0
    %954 = vmatpush1.msra.mxu0 0.0
    %955 = vmatprep.subr.mxu0 0.0
    %956 = vmatpush1.msra.mxu0 0.0
    %957 = vmatprep.subr.mxu0 0.0
    %958 = vmatpush1.msra.mxu0 0.0
    %959 = vmatprep.subr.mxu0 0.0
    %960 = vmatpush1.msra.mxu0 0.0
    %961 = vmatprep.subr.mxu0 0.0
    %962 = vmatpush1.msra.mxu0 %v220
    %963 = vmatprep.subr.mxu0 0.0
    %964 = vmatpush1.msra.mxu0 %v219
    %965 = vmatprep.subr.mxu0 0.0
    %966 = vmatpush1.msra.mxu0 %v218
    %967 = vmatprep.subr.mxu0 0.0
    %968 = vmatpush1.msra.mxu0 %v217
    %969 = vmatprep.subr.mxu0 0.0
    %970 = vmatpush1.msra.mxu0 %v216
    %971 = vmatprep.subr.mxu0 0.0
    %972 = vmatpush1.msra.mxu0 %v215
    %973 = vmatprep.subr.mxu0 0.0
    %974 = vmatpush1.msra.mxu0 %v214
    %975 = vmatprep.subr.mxu0 0.0
    %976 = vmatpush1.msra.mxu0 %v213
    %977 = vmatprep.subr.mxu0 0.0
    %978 = vmatpush2.msra.mxu0 0.0
    %979 = vmatprep.subr.mxu0 0.0
    %980 = vmatpush2.msra.mxu0 0.0
    %981 = vmatprep.subr.mxu0 0.0
    %982 = vmatpush2.msra.mxu0 0.0
    %983 = vmatprep.subr.mxu0 0.0
    %984 = vmatpush2.msra.mxu0 0.0
    %985 = vmatprep.subr.mxu0 0.0
    %986 = vmatpush2.msra.mxu0 0.0
    %987 = vmatprep.subr.mxu0 0.0
    %988 = vmatpush2.msra.mxu0 0.0
    %989 = vmatprep.subr.mxu0 0.0
    %990 = vmatpush2.msra.mxu0 0.0
    %991 = vmatprep.subr.mxu0 0.0
    %992 = vmatpush2.msra.mxu0 0.0
    %993 = vmatprep.subr.mxu0 0.0
    %994 = vmatpush2.msra.mxu0 0.0
    %995 = vmatprep.subr.mxu0 0.0
    %996 = vmatpush2.msra.mxu0 0.0
    %997 = vmatprep.subr.mxu0 0.0
    %998 = vmatpush2.msra.mxu0 0.0
    %999 = vmatprep.subr.mxu0 0.0
    %1000 = vmatpush2.msra.mxu0 0.0
    %1001 = vmatprep.subr.mxu0 0.0
    %1002 = vmatpush2.msra.mxu0 0.0
    %1003 = vmatprep.subr.mxu0 0.0
    %1004 = vmatpush2.msra.mxu0 0.0
    %1005 = vmatprep.subr.mxu0 0.0
    %1006 = vmatpush2.msra.mxu0 0.0
    %1007 = vmatprep.subr.mxu0 0.0
    %1008 = vmatpush2.msra.mxu0 0.0
    %1009 = vmatprep.mubr.f32.mxu0 0.0
    %1010 = vmatmul.mubr.f32.gmra.mxu0 %v943
    %v1011 = vpop.f32.mrf.mxu0
    %v1012 = vadd.f32 %v330, %v1011
    %v1013 = vpop.f32.mrf.mxu0
    %1014 = vdwg.mxu0
    %v1015 = vxor.u32 %v1012, 2147483648
    %v1016 = vmul.f32 %v1015, 1.442695
    %v1017 = vpow.pop %v1016
    %v1018 = vadd.f32 %v1017, 1.0
    %v1019 = vrcp.pop %v1018
    %v1020 = vmul.f32 1.0, %v1019
    %v1021 = vtanh.pop %v1012
    %v1022 = vmul.f32 %v1020, %v829
    %1024 = vrot.lane.b32.xlu0 %v1021, 64
    %v1025 = vpop.permute.xlu0 %1024
    %v1027 = vmul.f32 %v1020, %v1025
    %1029 = vrot.lane.b32.xlu0 %v1027, 32
    %v1030 = vpop.permute.xlu0 %1029
    %v1032 = vadd.f32 %v1022, %v1030
    %v1033 = vtanh.pop %v1032
    %1035 = vrot.lane.b32.xlu0 %v1033, 64
    %v1036 = vpop.permute.xlu0 %1035
    %v1038 = vmul.f32 %v1020, %v1036
    %v1039 = vsel %vm222, %v935, 0
    %1041 = vmatprep.subr.mxu0 0.0
    %1042 = vmatpush1.msra.mxu0 0.0
    %1043 = vmatprep.subr.mxu0 0.0
    %1044 = vmatpush1.msra.mxu0 0.0
    %1045 = vmatprep.subr.mxu0 0.0
    %1046 = vmatpush1.msra.mxu0 0.0
    %1047 = vmatprep.subr.mxu0 0.0
    %1048 = vmatpush1.msra.mxu0 0.0
    %1049 = vmatprep.subr.mxu0 0.0
    %1050 = vmatpush1.msra.mxu0 0.0
    %1051 = vmatprep.subr.mxu0 0.0
    %1052 = vmatpush1.msra.mxu0 0.0
    %1053 = vmatprep.subr.mxu0 0.0
    %1054 = vmatpush1.msra.mxu0 0.0
    %1055 = vmatprep.subr.mxu0 0.0
    %1056 = vmatpush1.msra.mxu0 0.0
    %1057 = vmatprep.subr.mxu0 0.0
    %1058 = vmatpush1.msra.mxu0 0.0
    %1059 = vmatprep.subr.mxu0 0.0
    %1060 = vmatpush1.msra.mxu0 0.0
    %1061 = vmatprep.subr.mxu0 0.0
    %1062 = vmatpush1.msra.mxu0 0.0
    %1063 = vmatprep.subr.mxu0 0.0
    %1064 = vmatpush1.msra.mxu0 0.0
    %1065 = vmatprep.subr.mxu0 0.0
    %1066 = vmatpush1.msra.mxu0 %v212
    %1067 = vmatprep.subr.mxu0 0.0
    %1068 = vmatpush1.msra.mxu0 %v211
    %1069 = vmatprep.subr.mxu0 0.0
    %1070 = vmatpush1.msra.mxu0 %v210
    %1071 = vmatprep.subr.mxu0 0.0
    %1072 = vmatpush1.msra.mxu0 %v209
    %1073 = vmatprep.subr.mxu0 0.0
    %1074 = vmatpush2.msra.mxu0 0.0
    %1075 = vmatprep.subr.mxu0 0.0
    %1076 = vmatpush2.msra.mxu0 0.0
    %1077 = vmatprep.subr.mxu0 0.0
    %1078 = vmatpush2.msra.mxu0 0.0
    %1079 = vmatprep.subr.mxu0 0.0
    %1080 = vmatpush2.msra.mxu0 0.0
    %1081 = vmatprep.subr.mxu0 0.0
    %1082 = vmatpush2.msra.mxu0 0.0
    %1083 = vmatprep.subr.mxu0 0.0
    %1084 = vmatpush2.msra.mxu0 0.0
    %1085 = vmatprep.subr.mxu0 0.0
    %1086 = vmatpush2.msra.mxu0 0.0
    %1087 = vmatprep.subr.mxu0 0.0
    %1088 = vmatpush2.msra.mxu0 0.0
    %1089 = vmatprep.subr.mxu0 0.0
    %1090 = vmatpush2.msra.mxu0 0.0
    %1091 = vmatprep.subr.mxu0 0.0
    %1092 = vmatpush2.msra.mxu0 0.0
    %1093 = vmatprep.subr.mxu0 0.0
    %1094 = vmatpush2.msra.mxu0 0.0
    %1095 = vmatprep.subr.mxu0 0.0
    %1096 = vmatpush2.msra.mxu0 0.0
    %1097 = vmatprep.subr.mxu0 0.0
    %1098 = vmatpush2.msra.mxu0 0.0
    %1099 = vmatprep.subr.mxu0 0.0
    %1100 = vmatpush2.msra.mxu0 0.0
    %1101 = vmatprep.subr.mxu0 0.0
    %1102 = vmatpush2.msra.mxu0 0.0
    %1103 = vmatprep.subr.mxu0 0.0
    %1104 = vmatpush2.msra.mxu0 0.0
    %1105 = vmatprep.mubr.f32.mxu0 0.0
    %1106 = vmatmul.mubr.f32.gmra.mxu0 %v1039
    %v1107 = vpop.f32.mrf.mxu0
    %v1108 = vadd.f32 0.0, %v1107
    %v1109 = vpop.f32.mrf.mxu0
    %1110 = vdwg.mxu0
    %v1111 = vadd.f32 %v191, %v1108
    %v1112 = vxor.u32 %v1111, 2147483648
    %v1113 = vmul.f32 %v1112, 1.442695
    %v1114 = vpow.pop %v1113
    %v1115 = vadd.f32 %v1114, 1.0
    %v1116 = vrcp.pop %v1115
    %v1117 = vmul.f32 1.0, %v1116
    %v1118 = vtanh.pop %v1111
    %v1119 = vmul.f32 %v1117, %v926
    %1121 = vrot.lane.b32.xlu0 %v1118, 64
    %v1122 = vpop.permute.xlu0 %1121
    %v1124 = vmul.f32 %v1117, %v1122
    %1126 = vrot.lane.b32.xlu0 %v1124, 32
    %v1127 = vpop.permute.xlu0 %1126
    %v1129 = vadd.f32 %v1119, %v1127
    %v1130 = vtanh.pop %v1129
    %1132 = vrot.lane.b32.xlu0 %v1130, 64
    %v1133 = vpop.permute.xlu0 %1132
    %v1135 = vmul.f32 %v1117, %v1133
    %1137 = vrot.lane.b32.xlu0 %v1135, 32
    %v1138 = vpop.permute.xlu0 %1137
    %1141 = vrot.lane.b32.xlu0 %v1038, 64
    %v1142 = vpop.permute.xlu0 %1141
    %v1144 = vsel %vm222, %v1138, %v1142
    %v1146 = vsel %vm332, %v1144, 0
    %1148 = vmatprep.subr.mxu0 0.0
    %1149 = vmatpush1.msra.mxu0 0.0
    %1150 = vmatprep.subr.mxu0 0.0
    %1151 = vmatpush1.msra.mxu0 0.0
    %1152 = vmatprep.subr.mxu0 0.0
    %1153 = vmatpush1.msra.mxu0 0.0
    %1154 = vmatprep.subr.mxu0 0.0
    %1155 = vmatpush1.msra.mxu0 0.0
    %1156 = vmatprep.subr.mxu0 0.0
    %1157 = vmatpush1.msra.mxu0 0.0
    %1158 = vmatprep.subr.mxu0 0.0
    %1159 = vmatpush1.msra.mxu0 0.0
    %1160 = vmatprep.subr.mxu0 0.0
    %1161 = vmatpush1.msra.mxu0 0.0
    %1162 = vmatprep.subr.mxu0 0.0
    %1163 = vmatpush1.msra.mxu0 0.0
    %1164 = vmatprep.subr.mxu0 0.0
    %1165 = vmatpush1.msra.mxu0 %v220
    %1166 = vmatprep.subr.mxu0 0.0
    %1167 = vmatpush1.msra.mxu0 %v219
    %1168 = vmatprep.subr.mxu0 0.0
    %1169 = vmatpush1.msra.mxu0 %v218
    %1170 = vmatprep.subr.mxu0 0.0
    %1171 = vmatpush1.msra.mxu0 %v217
    %1172 = vmatprep.subr.mxu0 0.0
    %1173 = vmatpush1.msra.mxu0 %v216
    %1174 = vmatprep.subr.mxu0 0.0
    %1175 = vmatpush1.msra.mxu0 %v215
    %1176 = vmatprep.subr.mxu0 0.0
    %1177 = vmatpush1.msra.mxu0 %v214
    %1178 = vmatprep.subr.mxu0 0.0
    %1179 = vmatpush1.msra.mxu0 %v213
    %1180 = vmatprep.subr.mxu0 0.0
    %1181 = vmatpush2.msra.mxu0 0.0
    %1182 = vmatprep.subr.mxu0 0.0
    %1183 = vmatpush2.msra.mxu0 0.0
    %1184 = vmatprep.subr.mxu0 0.0
    %1185 = vmatpush2.msra.mxu0 0.0
    %1186 = vmatprep.subr.mxu0 0.0
    %1187 = vmatpush2.msra.mxu0 0.0
    %1188 = vmatprep.subr.mxu0 0.0
    %1189 = vmatpush2.msra.mxu0 0.0
    %1190 = vmatprep.subr.mxu0 0.0
    %1191 = vmatpush2.msra.mxu0 0.0
    %1192 = vmatprep.subr.mxu0 0.0
    %1193 = vmatpush2.msra.mxu0 0.0
    %1194 = vmatprep.subr.mxu0 0.0
    %1195 = vmatpush2.msra.mxu0 0.0
    %1196 = vmatprep.subr.mxu0 0.0
    %1197 = vmatpush2.msra.mxu0 0.0
    %1198 = vmatprep.subr.mxu0 0.0
    %1199 = vmatpush2.msra.mxu0 0.0
    %1200 = vmatprep.subr.mxu0 0.0
    %1201 = vmatpush2.msra.mxu0 0.0
    %1202 = vmatprep.subr.mxu0 0.0
    %1203 = vmatpush2.msra.mxu0 0.0
    %1204 = vmatprep.subr.mxu0 0.0
    %1205 = vmatpush2.msra.mxu0 0.0
    %1206 = vmatprep.subr.mxu0 0.0
    %1207 = vmatpush2.msra.mxu0 0.0
    %1208 = vmatprep.subr.mxu0 0.0
    %1209 = vmatpush2.msra.mxu0 0.0
    %1210 = vmatprep.subr.mxu0 0.0
    %1211 = vmatpush2.msra.mxu0 0.0
    %1212 = vmatprep.mubr.f32.mxu0 0.0
    %1213 = vmatmul.mubr.f32.gmra.mxu0 %v1146
    %v1214 = vpop.f32.mrf.mxu0
    %v1215 = vadd.f32 %v330, %v1214
    %v1216 = vpop.f32.mrf.mxu0
    %1217 = vdwg.mxu0
    %v1218 = vxor.u32 %v1215, 2147483648
    %v1219 = vmul.f32 %v1218, 1.442695
    %v1220 = vpow.pop %v1219
    %v1221 = vadd.f32 %v1220, 1.0
    %v1222 = vrcp.pop %v1221
    %v1223 = vmul.f32 1.0, %v1222
    %v1224 = vtanh.pop %v1215
    %v1225 = vmul.f32 %v1223, %v1032
    %1227 = vrot.lane.b32.xlu0 %v1224, 64
    %v1228 = vpop.permute.xlu0 %1227
    %v1230 = vmul.f32 %v1223, %v1228
    %1232 = vrot.lane.b32.xlu0 %v1230, 32
    %v1233 = vpop.permute.xlu0 %1232
    %v1235 = vadd.f32 %v1225, %v1233
    %v1236 = vtanh.pop %v1235
    %1238 = vrot.lane.b32.xlu0 %v1236, 64
    %v1239 = vpop.permute.xlu0 %1238
    %v1241 = vmul.f32 %v1223, %v1239
    %v1242 = vsel %vm222, %v1138, 0
    %1244 = vmatprep.subr.mxu0 0.0
    %1245 = vmatpush1.msra.mxu0 0.0
    %1246 = vmatprep.subr.mxu0 0.0
    %1247 = vmatpush1.msra.mxu0 0.0
    %1248 = vmatprep.subr.mxu0 0.0
    %1249 = vmatpush1.msra.mxu0 0.0
    %1250 = vmatprep.subr.mxu0 0.0
    %1251 = vmatpush1.msra.mxu0 0.0
    %1252 = vmatprep.subr.mxu0 0.0
    %1253 = vmatpush1.msra.mxu0 0.0
    %1254 = vmatprep.subr.mxu0 0.0
    %1255 = vmatpush1.msra.mxu0 0.0
    %1256 = vmatprep.subr.mxu0 0.0
    %1257 = vmatpush1.msra.mxu0 0.0
    %1258 = vmatprep.subr.mxu0 0.0
    %1259 = vmatpush1.msra.mxu0 0.0
    %1260 = vmatprep.subr.mxu0 0.0
    %1261 = vmatpush1.msra.mxu0 0.0
    %1262 = vmatprep.subr.mxu0 0.0
    %1263 = vmatpush1.msra.mxu0 0.0
    %1264 = vmatprep.subr.mxu0 0.0
    %1265 = vmatpush1.msra.mxu0 0.0
    %1266 = vmatprep.subr.mxu0 0.0
    %1267 = vmatpush1.msra.mxu0 0.0
    %1268 = vmatprep.subr.mxu0 0.0
    %1269 = vmatpush1.msra.mxu0 %v212
    %1270 = vmatprep.subr.mxu0 0.0
    %1271 = vmatpush1.msra.mxu0 %v211
    %1272 = vmatprep.subr.mxu0 0.0
    %1273 = vmatpush1.msra.mxu0 %v210
    %1274 = vmatprep.subr.mxu0 0.0
    %1275 = vmatpush1.msra.mxu0 %v209
    %1276 = vmatprep.subr.mxu0 0.0
    %1277 = vmatpush2.msra.mxu0 0.0
    %1278 = vmatprep.subr.mxu0 0.0
    %1279 = vmatpush2.msra.mxu0 0.0
    %1280 = vmatprep.subr.mxu0 0.0
    %1281 = vmatpush2.msra.mxu0 0.0
    %1282 = vmatprep.subr.mxu0 0.0
    %1283 = vmatpush2.msra.mxu0 0.0
    %1284 = vmatprep.subr.mxu0 0.0
    %1285 = vmatpush2.msra.mxu0 0.0
    %1286 = vmatprep.subr.mxu0 0.0
    %1287 = vmatpush2.msra.mxu0 0.0
    %1288 = vmatprep.subr.mxu0 0.0
    %1289 = vmatpush2.msra.mxu0 0.0
    %1290 = vmatprep.subr.mxu0 0.0
    %1291 = vmatpush2.msra.mxu0 0.0
    %1292 = vmatprep.subr.mxu0 0.0
    %1293 = vmatpush2.msra.mxu0 0.0
    %1294 = vmatprep.subr.mxu0 0.0
    %1295 = vmatpush2.msra.mxu0 0.0
    %1296 = vmatprep.subr.mxu0 0.0
    %1297 = vmatpush2.msra.mxu0 0.0
    %1298 = vmatprep.subr.mxu0 0.0
    %1299 = vmatpush2.msra.mxu0 0.0
    %1300 = vmatprep.subr.mxu0 0.0
    %1301 = vmatpush2.msra.mxu0 0.0
    %1302 = vmatprep.subr.mxu0 0.0
    %1303 = vmatpush2.msra.mxu0 0.0
    %1304 = vmatprep.subr.mxu0 0.0
    %1305 = vmatpush2.msra.mxu0 0.0
    %1306 = vmatprep.subr.mxu0 0.0
    %1307 = vmatpush2.msra.mxu0 0.0
    %1308 = vmatprep.mubr.f32.mxu0 0.0
    %1309 = vmatmul.mubr.f32.gmra.mxu0 %v1242
    %v1310 = vpop.f32.mrf.mxu0
    %v1311 = vadd.f32 0.0, %v1310
    %v1312 = vpop.f32.mrf.mxu0
    %1313 = vdwg.mxu0
    %v1314 = vadd.f32 %v196, %v1311
    %v1315 = vxor.u32 %v1314, 2147483648
    %v1316 = vmul.f32 %v1315, 1.442695
    %v1317 = vpow.pop %v1316
    %v1318 = vadd.f32 %v1317, 1.0
    %v1319 = vrcp.pop %v1318
    %v1320 = vmul.f32 1.0, %v1319
    %v1321 = vtanh.pop %v1314
    %v1322 = vmul.f32 %v1320, %v1129
    %1324 = vrot.lane.b32.xlu0 %v1321, 64
    %v1325 = vpop.permute.xlu0 %1324
    %v1327 = vmul.f32 %v1320, %v1325
    %1329 = vrot.lane.b32.xlu0 %v1327, 32
    %v1330 = vpop.permute.xlu0 %1329
    %v1332 = vadd.f32 %v1322, %v1330
    %v1333 = vtanh.pop %v1332
    %1335 = vrot.lane.b32.xlu0 %v1333, 64
    %v1336 = vpop.permute.xlu0 %1335
    %v1338 = vmul.f32 %v1320, %v1336
    %1340 = vrot.lane.b32.xlu0 %v1338, 32
    %v1341 = vpop.permute.xlu0 %1340
    %1344 = vrot.lane.b32.xlu0 %v1241, 64
    %v1345 = vpop.permute.xlu0 %1344
    %v1347 = vsel %vm222, %v1341, %v1345
    %v1349 = vsel %vm332, %v1347, 0
    %1351 = vmatprep.subr.mxu0 0.0
    %1352 = vmatpush1.msra.mxu0 0.0
    %1353 = vmatprep.subr.mxu0 0.0
    %1354 = vmatpush1.msra.mxu0 0.0
    %1355 = vmatprep.subr.mxu0 0.0
    %1356 = vmatpush1.msra.mxu0 0.0
    %1357 = vmatprep.subr.mxu0 0.0
    %1358 = vmatpush1.msra.mxu0 0.0
    %1359 = vmatprep.subr.mxu0 0.0
    %1360 = vmatpush1.msra.mxu0 0.0
    %1361 = vmatprep.subr.mxu0 0.0
    %1362 = vmatpush1.msra.mxu0 0.0
    %1363 = vmatprep.subr.mxu0 0.0
    %1364 = vmatpush1.msra.mxu0 0.0
    %1365 = vmatprep.subr.mxu0 0.0
    %1366 = vmatpush1.msra.mxu0 0.0
    %1367 = vmatprep.subr.mxu0 0.0
    %1368 = vmatpush1.msra.mxu0 %v220
    %1369 = vmatprep.subr.mxu0 0.0
    %1370 = vmatpush1.msra.mxu0 %v219
    %1371 = vmatprep.subr.mxu0 0.0
    %1372 = vmatpush1.msra.mxu0 %v218
    %1373 = vmatprep.subr.mxu0 0.0
    %1374 = vmatpush1.msra.mxu0 %v217
    %1375 = vmatprep.subr.mxu0 0.0
    %1376 = vmatpush1.msra.mxu0 %v216
    %1377 = vmatprep.subr.mxu0 0.0
    %1378 = vmatpush1.msra.mxu0 %v215
    %1379 = vmatprep.subr.mxu0 0.0
    %1380 = vmatpush1.msra.mxu0 %v214
    %1381 = vmatprep.subr.mxu0 0.0
    %1382 = vmatpush1.msra.mxu0 %v213
    %1383 = vmatprep.subr.mxu0 0.0
    %1384 = vmatpush2.msra.mxu0 0.0
    %1385 = vmatprep.subr.mxu0 0.0
    %1386 = vmatpush2.msra.mxu0 0.0
    %1387 = vmatprep.subr.mxu0 0.0
    %1388 = vmatpush2.msra.mxu0 0.0
    %1389 = vmatprep.subr.mxu0 0.0
    %1390 = vmatpush2.msra.mxu0 0.0
    %1391 = vmatprep.subr.mxu0 0.0
    %1392 = vmatpush2.msra.mxu0 0.0
    %1393 = vmatprep.subr.mxu0 0.0
    %1394 = vmatpush2.msra.mxu0 0.0
    %1395 = vmatprep.subr.mxu0 0.0
    %1396 = vmatpush2.msra.mxu0 0.0
    %1397 = vmatprep.subr.mxu0 0.0
    %1398 = vmatpush2.msra.mxu0 0.0
    %1399 = vmatprep.subr.mxu0 0.0
    %1400 = vmatpush2.msra.mxu0 0.0
    %1401 = vmatprep.subr.mxu0 0.0
    %1402 = vmatpush2.msra.mxu0 0.0
    %1403 = vmatprep.subr.mxu0 0.0
    %1404 = vmatpush2.msra.mxu0 0.0
    %1405 = vmatprep.subr.mxu0 0.0
    %1406 = vmatpush2.msra.mxu0 0.0
    %1407 = vmatprep.subr.mxu0 0.0
    %1408 = vmatpush2.msra.mxu0 0.0
    %1409 = vmatprep.subr.mxu0 0.0
    %1410 = vmatpush2.msra.mxu0 0.0
    %1411 = vmatprep.subr.mxu0 0.0
    %1412 = vmatpush2.msra.mxu0 0.0
    %1413 = vmatprep.subr.mxu0 0.0
    %1414 = vmatpush2.msra.mxu0 0.0
    %1415 = vmatprep.mubr.f32.mxu0 0.0
    %1416 = vmatmul.mubr.f32.gmra.mxu0 %v1349
    %v1417 = vpop.f32.mrf.mxu0
    %v1418 = vadd.f32 %v330, %v1417
    %v1419 = vpop.f32.mrf.mxu0
    %1420 = vdwg.mxu0
    %v1421 = vxor.u32 %v1418, 2147483648
    %v1422 = vmul.f32 %v1421, 1.442695
    %v1423 = vpow.pop %v1422
    %v1424 = vadd.f32 %v1423, 1.0
    %v1425 = vrcp.pop %v1424
    %v1426 = vmul.f32 1.0, %v1425
    %v1427 = vtanh.pop %v1418
    %v1428 = vmul.f32 %v1426, %v1235
    %1430 = vrot.lane.b32.xlu0 %v1427, 64
    %v1431 = vpop.permute.xlu0 %1430
    %v1433 = vmul.f32 %v1426, %v1431
    %1435 = vrot.lane.b32.xlu0 %v1433, 32
    %v1436 = vpop.permute.xlu0 %1435
    %v1438 = vadd.f32 %v1428, %v1436
    %v1439 = vtanh.pop %v1438
    %1441 = vrot.lane.b32.xlu0 %v1439, 64
    %v1442 = vpop.permute.xlu0 %1441
    %v1444 = vmul.f32 %v1426, %v1442
    %v1445 = vsel %vm222, %v1341, 0
    %1447 = vmatprep.subr.mxu0 0.0
    %1448 = vmatpush1.msra.mxu0 0.0
    %1449 = vmatprep.subr.mxu0 0.0
    %1450 = vmatpush1.msra.mxu0 0.0
    %1451 = vmatprep.subr.mxu0 0.0
    %1452 = vmatpush1.msra.mxu0 0.0
    %1453 = vmatprep.subr.mxu0 0.0
    %1454 = vmatpush1.msra.mxu0 0.0
    %1455 = vmatprep.subr.mxu0 0.0
    %1456 = vmatpush1.msra.mxu0 0.0
    %1457 = vmatprep.subr.mxu0 0.0
    %1458 = vmatpush1.msra.mxu0 0.0
    %1459 = vmatprep.subr.mxu0 0.0
    %1460 = vmatpush1.msra.mxu0 0.0
    %1461 = vmatprep.subr.mxu0 0.0
    %1462 = vmatpush1.msra.mxu0 0.0
    %1463 = vmatprep.subr.mxu0 0.0
    %1464 = vmatpush1.msra.mxu0 0.0
    %1465 = vmatprep.subr.mxu0 0.0
    %1466 = vmatpush1.msra.mxu0 0.0
    %1467 = vmatprep.subr.mxu0 0.0
    %1468 = vmatpush1.msra.mxu0 0.0
    %1469 = vmatprep.subr.mxu0 0.0
    %1470 = vmatpush1.msra.mxu0 0.0
    %1471 = vmatprep.subr.mxu0 0.0
    %1472 = vmatpush1.msra.mxu0 %v212
    %1473 = vmatprep.subr.mxu0 0.0
    %1474 = vmatpush1.msra.mxu0 %v211
    %1475 = vmatprep.subr.mxu0 0.0
    %1476 = vmatpush1.msra.mxu0 %v210
    %1477 = vmatprep.subr.mxu0 0.0
    %1478 = vmatpush1.msra.mxu0 %v209
    %1479 = vmatprep.subr.mxu0 0.0
    %1480 = vmatpush2.msra.mxu0 0.0
    %1481 = vmatprep.subr.mxu0 0.0
    %1482 = vmatpush2.msra.mxu0 0.0
    %1483 = vmatprep.subr.mxu0 0.0
    %1484 = vmatpush2.msra.mxu0 0.0
    %1485 = vmatprep.subr.mxu0 0.0
    %1486 = vmatpush2.msra.mxu0 0.0
    %1487 = vmatprep.subr.mxu0 0.0
    %1488 = vmatpush2.msra.mxu0 0.0
    %1489 = vmatprep.subr.mxu0 0.0
    %1490 = vmatpush2.msra.mxu0 0.0
    %1491 = vmatprep.subr.mxu0 0.0
    %1492 = vmatpush2.msra.mxu0 0.0
    %1493 = vmatprep.subr.mxu0 0.0
    %1494 = vmatpush2.msra.mxu0 0.0
    %1495 = vmatprep.subr.mxu0 0.0
    %1496 = vmatpush2.msra.mxu0 0.0
    %1497 = vmatprep.subr.mxu0 0.0
    %1498 = vmatpush2.msra.mxu0 0.0
    %1499 = vmatprep.subr.mxu0 0.0
    %1500 = vmatpush2.msra.mxu0 0.0
    %1501 = vmatprep.subr.mxu0 0.0
    %1502 = vmatpush2.msra.mxu0 0.0
    %1503 = vmatprep.subr.mxu0 0.0
    %1504 = vmatpush2.msra.mxu0 0.0
    %1505 = vmatprep.subr.mxu0 0.0
    %1506 = vmatpush2.msra.mxu0 0.0
    %1507 = vmatprep.subr.mxu0 0.0
    %1508 = vmatpush2.msra.mxu0 0.0
    %1509 = vmatprep.subr.mxu0 0.0
    %1510 = vmatpush2.msra.mxu0 0.0
    %1511 = vmatprep.mubr.f32.mxu0 0.0
    %1512 = vmatmul.mubr.f32.gmra.mxu0 %v1445
    %v1513 = vpop.f32.mrf.mxu0
    %v1514 = vadd.f32 0.0, %v1513
    %v1515 = vpop.f32.mrf.mxu0
    %1516 = vdwg.mxu0
    %v1517 = vadd.f32 %v201, %v1514
    %v1518 = vxor.u32 %v1517, 2147483648
    %v1519 = vmul.f32 %v1518, 1.442695
    %v1520 = vpow.pop %v1519
    %v1521 = vadd.f32 %v1520, 1.0
    %v1522 = vrcp.pop %v1521
    %v1523 = vmul.f32 1.0, %v1522
    %v1524 = vtanh.pop %v1517
    %v1525 = vmul.f32 %v1523, %v1332
    %1527 = vrot.lane.b32.xlu0 %v1524, 64
    %v1528 = vpop.permute.xlu0 %1527
    %v1530 = vmul.f32 %v1523, %v1528
    %1532 = vrot.lane.b32.xlu0 %v1530, 32
    %v1533 = vpop.permute.xlu0 %1532
    %v1535 = vadd.f32 %v1525, %v1533
    %v1536 = vtanh.pop %v1535
    %1538 = vrot.lane.b32.xlu0 %v1536, 64
    %v1539 = vpop.permute.xlu0 %1538
    %v1541 = vmul.f32 %v1523, %v1539
    %1543 = vrot.lane.b32.xlu0 %v1541, 32
    %v1544 = vpop.permute.xlu0 %1543
    %1547 = vrot.lane.b32.xlu0 %v1444, 64
    %v1548 = vpop.permute.xlu0 %1547
    %v1550 = vsel %vm222, %v1544, %v1548
    %v1552 = vsel %vm332, %v1550, 0
    %1554 = vmatprep.subr.mxu0 0.0
    %1555 = vmatpush1.msra.mxu0 0.0
    %1556 = vmatprep.subr.mxu0 0.0
    %1557 = vmatpush1.msra.mxu0 0.0
    %1558 = vmatprep.subr.mxu0 0.0
    %1559 = vmatpush1.msra.mxu0 0.0
    %1560 = vmatprep.subr.mxu0 0.0
    %1561 = vmatpush1.msra.mxu0 0.0
    %1562 = vmatprep.subr.mxu0 0.0
    %1563 = vmatpush1.msra.mxu0 0.0
    %1564 = vmatprep.subr.mxu0 0.0
    %1565 = vmatpush1.msra.mxu0 0.0
    %1566 = vmatprep.subr.mxu0 0.0
    %1567 = vmatpush1.msra.mxu0 0.0
    %1568 = vmatprep.subr.mxu0 0.0
    %1569 = vmatpush1.msra.mxu0 0.0
    %1570 = vmatprep.subr.mxu0 0.0
    %1571 = vmatpush1.msra.mxu0 %v220
    %1572 = vmatprep.subr.mxu0 0.0
    %1573 = vmatpush1.msra.mxu0 %v219
    %1574 = vmatprep.subr.mxu0 0.0
    %1575 = vmatpush1.msra.mxu0 %v218
    %1576 = vmatprep.subr.mxu0 0.0
    %1577 = vmatpush1.msra.mxu0 %v217
    %1578 = vmatprep.subr.mxu0 0.0
    %1579 = vmatpush1.msra.mxu0 %v216
    %1580 = vmatprep.subr.mxu0 0.0
    %1581 = vmatpush1.msra.mxu0 %v215
    %1582 = vmatprep.subr.mxu0 0.0
    %1583 = vmatpush1.msra.mxu0 %v214
    %1584 = vmatprep.subr.mxu0 0.0
    %1585 = vmatpush1.msra.mxu0 %v213
    %1586 = vmatprep.subr.mxu0 0.0
    %1587 = vmatpush2.msra.mxu0 0.0
    %1588 = vmatprep.subr.mxu0 0.0
    %1589 = vmatpush2.msra.mxu0 0.0
    %1590 = vmatprep.subr.mxu0 0.0
    %1591 = vmatpush2.msra.mxu0 0.0
    %1592 = vmatprep.subr.mxu0 0.0
    %1593 = vmatpush2.msra.mxu0 0.0
    %1594 = vmatprep.subr.mxu0 0.0
    %1595 = vmatpush2.msra.mxu0 0.0
    %1596 = vmatprep.subr.mxu0 0.0
    %1597 = vmatpush2.msra.mxu0 0.0
    %1598 = vmatprep.subr.mxu0 0.0
    %1599 = vmatpush2.msra.mxu0 0.0
    %1600 = vmatprep.subr.mxu0 0.0
    %1601 = vmatpush2.msra.mxu0 0.0
    %1602 = vmatprep.subr.mxu0 0.0
    %1603 = vmatpush2.msra.mxu0 0.0
    %1604 = vmatprep.subr.mxu0 0.0
    %1605 = vmatpush2.msra.mxu0 0.0
    %1606 = vmatprep.subr.mxu0 0.0
    %1607 = vmatpush2.msra.mxu0 0.0
    %1608 = vmatprep.subr.mxu0 0.0
    %1609 = vmatpush2.msra.mxu0 0.0
    %1610 = vmatprep.subr.mxu0 0.0
    %1611 = vmatpush2.msra.mxu0 0.0
    %1612 = vmatprep.subr.mxu0 0.0
    %1613 = vmatpush2.msra.mxu0 0.0
    %1614 = vmatprep.subr.mxu0 0.0
    %1615 = vmatpush2.msra.mxu0 0.0
    %1616 = vmatprep.subr.mxu0 0.0
    %1617 = vmatpush2.msra.mxu0 0.0
    %1618 = vmatprep.mubr.f32.mxu0 0.0
    %1619 = vmatmul.mubr.f32.gmra.mxu0 %v1552
    %v1620 = vpop.f32.mrf.mxu0
    %v1621 = vadd.f32 %v330, %v1620
    %v1622 = vpop.f32.mrf.mxu0
    %1623 = vdwg.mxu0
    %v1624 = vxor.u32 %v1621, 2147483648
    %v1625 = vmul.f32 %v1624, 1.442695
    %v1626 = vpow.pop %v1625
    %v1627 = vadd.f32 %v1626, 1.0
    %v1628 = vrcp.pop %v1627
    %v1629 = vmul.f32 1.0, %v1628
    %v1630 = vtanh.pop %v1621
    %v1631 = vmul.f32 %v1629, %v1438
    %1633 = vrot.lane.b32.xlu0 %v1630, 64
    %v1634 = vpop.permute.xlu0 %1633
    %v1636 = vmul.f32 %v1629, %v1634
    %1638 = vrot.lane.b32.xlu0 %v1636, 32
    %v1639 = vpop.permute.xlu0 %1638
    %v1641 = vadd.f32 %v1631, %v1639
    %v1642 = vtanh.pop %v1641
    %1644 = vrot.lane.b32.xlu0 %v1642, 64
    %v1645 = vpop.permute.xlu0 %1644
    %v1647 = vmul.f32 %v1629, %v1645
    %v1648 = vsel %vm222, %v1544, 0
    %1650 = vmatprep.subr.mxu0 0.0
    %1651 = vmatpush1.msra.mxu0 0.0
    %1652 = vmatprep.subr.mxu0 0.0
    %1653 = vmatpush1.msra.mxu0 0.0
    %1654 = vmatprep.subr.mxu0 0.0
    %1655 = vmatpush1.msra.mxu0 0.0
    %1656 = vmatprep.subr.mxu0 0.0
    %1657 = vmatpush1.msra.mxu0 0.0
    %1658 = vmatprep.subr.mxu0 0.0
    %1659 = vmatpush1.msra.mxu0 0.0
    %1660 = vmatprep.subr.mxu0 0.0
    %1661 = vmatpush1.msra.mxu0 0.0
    %1662 = vmatprep.subr.mxu0 0.0
    %1663 = vmatpush1.msra.mxu0 0.0
    %1664 = vmatprep.subr.mxu0 0.0
    %1665 = vmatpush1.msra.mxu0 0.0
    %1666 = vmatprep.subr.mxu0 0.0
    %1667 = vmatpush1.msra.mxu0 0.0
    %1668 = vmatprep.subr.mxu0 0.0
    %1669 = vmatpush1.msra.mxu0 0.0
    %1670 = vmatprep.subr.mxu0 0.0
    %1671 = vmatpush1.msra.mxu0 0.0
    %1672 = vmatprep.subr.mxu0 0.0
    %1673 = vmatpush1.msra.mxu0 0.0
    %1674 = vmatprep.subr.mxu0 0.0
    %1675 = vmatpush1.msra.mxu0 %v212
    %1676 = vmatprep.subr.mxu0 0.0
    %1677 = vmatpush1.msra.mxu0 %v211
    %1678 = vmatprep.subr.mxu0 0.0
    %1679 = vmatpush1.msra.mxu0 %v210
    %1680 = vmatprep.subr.mxu0 0.0
    %1681 = vmatpush1.msra.mxu0 %v209
    %1682 = vmatprep.subr.mxu0 0.0
    %1683 = vmatpush2.msra.mxu0 0.0
    %1684 = vmatprep.subr.mxu0 0.0
    %1685 = vmatpush2.msra.mxu0 0.0
    %1686 = vmatprep.subr.mxu0 0.0
    %1687 = vmatpush2.msra.mxu0 0.0
    %1688 = vmatprep.subr.mxu0 0.0
    %1689 = vmatpush2.msra.mxu0 0.0
    %1690 = vmatprep.subr.mxu0 0.0
    %1691 = vmatpush2.msra.mxu0 0.0
    %1692 = vmatprep.subr.mxu0 0.0
    %1693 = vmatpush2.msra.mxu0 0.0
    %1694 = vmatprep.subr.mxu0 0.0
    %1695 = vmatpush2.msra.mxu0 0.0
    %1696 = vmatprep.subr.mxu0 0.0
    %1697 = vmatpush2.msra.mxu0 0.0
    %1698 = vmatprep.subr.mxu0 0.0
    %1699 = vmatpush2.msra.mxu0 0.0
    %1700 = vmatprep.subr.mxu0 0.0
    %1701 = vmatpush2.msra.mxu0 0.0
    %1702 = vmatprep.subr.mxu0 0.0
    %1703 = vmatpush2.msra.mxu0 0.0
    %1704 = vmatprep.subr.mxu0 0.0
    %1705 = vmatpush2.msra.mxu0 0.0
    %1706 = vmatprep.subr.mxu0 0.0
    %1707 = vmatpush2.msra.mxu0 0.0
    %1708 = vmatprep.subr.mxu0 0.0
    %1709 = vmatpush2.msra.mxu0 0.0
    %1710 = vmatprep.subr.mxu0 0.0
    %1711 = vmatpush2.msra.mxu0 0.0
    %1712 = vmatprep.subr.mxu0 0.0
    %1713 = vmatpush2.msra.mxu0 0.0
    %1714 = vmatprep.mubr.f32.mxu0 0.0
    %1715 = vmatmul.mubr.f32.gmra.mxu0 %v1648
    %v1716 = vpop.f32.mrf.mxu0
    %v1717 = vadd.f32 0.0, %v1716
    %v1718 = vpop.f32.mrf.mxu0
    %1719 = vdwg.mxu0
    %v1720 = vadd.f32 %v206, %v1717
    %v1721 = vxor.u32 %v1720, 2147483648
    %v1722 = vmul.f32 %v1721, 1.442695
    %v1723 = vpow.pop %v1722
    %v1724 = vadd.f32 %v1723, 1.0
    %v1725 = vrcp.pop %v1724
    %v1726 = vmul.f32 1.0, %v1725
    %v1727 = vtanh.pop %v1720
    %v1728 = vmul.f32 %v1726, %v1535
    %1730 = vrot.lane.b32.xlu0 %v1727, 64
    %v1731 = vpop.permute.xlu0 %1730
    %v1733 = vmul.f32 %v1726, %v1731
    %1735 = vrot.lane.b32.xlu0 %v1733, 32
    %v1736 = vpop.permute.xlu0 %1735
    %v1738 = vadd.f32 %v1728, %v1736
    %v1739 = vtanh.pop %v1738
    %1741 = vrot.lane.b32.xlu0 %v1739, 64
    %v1742 = vpop.permute.xlu0 %1741
    %v1744 = vmul.f32 %v1726, %v1742
    %1746 = vrot.lane.b32.xlu0 %v1744, 32
    %v1747 = vpop.permute.xlu0 %1746
    %1750 = vrot.lane.b32.xlu0 %v1647, 64
    %v1751 = vpop.permute.xlu0 %1750
    %v1753 = vsel %vm222, %v1747, %v1751
    %v1755 = vsel %vm332, %v1753, 0
    %1757 = vmatprep.subr.mxu0 0.0
    %1758 = vmatpush1.msra.mxu0 0.0
    %1759 = vmatprep.subr.mxu0 0.0
    %1760 = vmatpush1.msra.mxu0 0.0
    %1761 = vmatprep.subr.mxu0 0.0
    %1762 = vmatpush1.msra.mxu0 0.0
    %1763 = vmatprep.subr.mxu0 0.0
    %1764 = vmatpush1.msra.mxu0 0.0
    %1765 = vmatprep.subr.mxu0 0.0
    %1766 = vmatpush1.msra.mxu0 0.0
    %1767 = vmatprep.subr.mxu0 0.0
    %1768 = vmatpush1.msra.mxu0 0.0
    %1769 = vmatprep.subr.mxu0 0.0
    %1770 = vmatpush1.msra.mxu0 0.0
    %1771 = vmatprep.subr.mxu0 0.0
    %1772 = vmatpush1.msra.mxu0 0.0
    %1773 = vmatprep.subr.mxu0 0.0
    %1774 = vmatpush1.msra.mxu0 %v220
    %1775 = vmatprep.subr.mxu0 0.0
    %1776 = vmatpush1.msra.mxu0 %v219
    %1777 = vmatprep.subr.mxu0 0.0
    %1778 = vmatpush1.msra.mxu0 %v218
    %1779 = vmatprep.subr.mxu0 0.0
    %1780 = vmatpush1.msra.mxu0 %v217
    %1781 = vmatprep.subr.mxu0 0.0
    %1782 = vmatpush1.msra.mxu0 %v216
    %1783 = vmatprep.subr.mxu0 0.0
    %1784 = vmatpush1.msra.mxu0 %v215
    %1785 = vmatprep.subr.mxu0 0.0
    %1786 = vmatpush1.msra.mxu0 %v214
    %1787 = vmatprep.subr.mxu0 0.0
    %1788 = vmatpush1.msra.mxu0 %v213
    %1789 = vmatprep.subr.mxu0 0.0
    %1790 = vmatpush2.msra.mxu0 0.0
    %1791 = vmatprep.subr.mxu0 0.0
    %1792 = vmatpush2.msra.mxu0 0.0
    %1793 = vmatprep.subr.mxu0 0.0
    %1794 = vmatpush2.msra.mxu0 0.0
    %1795 = vmatprep.subr.mxu0 0.0
    %1796 = vmatpush2.msra.mxu0 0.0
    %1797 = vmatprep.subr.mxu0 0.0
    %1798 = vmatpush2.msra.mxu0 0.0
    %1799 = vmatprep.subr.mxu0 0.0
    %1800 = vmatpush2.msra.mxu0 0.0
    %1801 = vmatprep.subr.mxu0 0.0
    %1802 = vmatpush2.msra.mxu0 0.0
    %1803 = vmatprep.subr.mxu0 0.0
    %1804 = vmatpush2.msra.mxu0 0.0
    %1805 = vmatprep.subr.mxu0 0.0
    %1806 = vmatpush2.msra.mxu0 0.0
    %1807 = vmatprep.subr.mxu0 0.0
    %1808 = vmatpush2.msra.mxu0 0.0
    %1809 = vmatprep.subr.mxu0 0.0
    %1810 = vmatpush2.msra.mxu0 0.0
    %1811 = vmatprep.subr.mxu0 0.0
    %1812 = vmatpush2.msra.mxu0 0.0
    %1813 = vmatprep.subr.mxu0 0.0
    %1814 = vmatpush2.msra.mxu0 0.0
    %1815 = vmatprep.subr.mxu0 0.0
    %1816 = vmatpush2.msra.mxu0 0.0
    %1817 = vmatprep.subr.mxu0 0.0
    %1818 = vmatpush2.msra.mxu0 0.0
    %1819 = vmatprep.subr.mxu0 0.0
    %1820 = vmatpush2.msra.mxu0 0.0
    %1821 = vmatprep.mubr.f32.mxu0 0.0
    %1822 = vmatmul.mubr.f32.gmra.mxu0 %v1755
    %v1823 = vpop.f32.mrf.mxu0
    %v1824 = vadd.f32 %v330, %v1823
    %v1825 = vpop.f32.mrf.mxu0
    %1826 = vdwg.mxu0
    %v1827 = vxor.u32 %v1824, 2147483648
    %v1828 = vmul.f32 %v1827, 1.442695
    %v1829 = vpow.pop %v1828
    %v1830 = vadd.f32 %v1829, 1.0
    %v1831 = vrcp.pop %v1830
    %v1832 = vmul.f32 1.0, %v1831
    %v1833 = vtanh.pop %v1824
    %v1834 = vmul.f32 %v1832, %v1641
    %1836 = vrot.lane.b32.xlu0 %v1833, 64
    %v1837 = vpop.permute.xlu0 %1836
    %v1839 = vmul.f32 %v1832, %v1837
    %1841 = vrot.lane.b32.xlu0 %v1839, 32
    %v1842 = vpop.permute.xlu0 %1841
    %v1844 = vadd.f32 %v1834, %v1842
    %v1845 = vtanh.pop %v1844
    %1847 = vrot.lane.b32.xlu0 %v1845, 64
    %v1848 = vpop.permute.xlu0 %1847
    %v1850 = vmul.f32 %v1832, %v1848
    %v1851 = vld [vmem:[#allocation5] sm:$0xff]
    %v1852 = vld [vmem:[#allocation5 + $0x8] sm:$0xff]
    %v1853 = vld [vmem:[#allocation5 + $0x10] sm:$0xff]
    %v1854 = vld [vmem:[#allocation5 + $0x18] sm:$0xff]
    %v1855 = vld [vmem:[%s7] sm:$0x1]
    %v1857 = vlaneseq
    %v1858 = vshrl.u32 %v1857, 7
    %v1859 = vsub.s32 0, %v1858
    %v1860 = vrot.slane %v1855, %v1859
    %1863 = vrot.lane.b32.xlu0 %v1850, 32
    %v1864 = vpop.permute.xlu0 %1863
    %v1865 = vsel %vm222, %v1864, 0
    %1867 = vmatprep.subr.mxu0 0.0
    %1868 = vmatpush1.msra.mxu0 0.0
    %1869 = vmatprep.subr.mxu0 0.0
    %1870 = vmatpush1.msra.mxu0 0.0
    %1871 = vmatprep.subr.mxu0 0.0
    %1872 = vmatpush1.msra.mxu0 0.0
    %1873 = vmatprep.subr.mxu0 0.0
    %1874 = vmatpush1.msra.mxu0 0.0
    %1875 = vmatprep.subr.mxu0 0.0
    %1876 = vmatpush1.msra.mxu0 0.0
    %1877 = vmatprep.subr.mxu0 0.0
    %1878 = vmatpush1.msra.mxu0 0.0
    %1879 = vmatprep.subr.mxu0 0.0
    %1880 = vmatpush1.msra.mxu0 0.0
    %1881 = vmatprep.subr.mxu0 0.0
    %1882 = vmatpush1.msra.mxu0 0.0
    %1883 = vmatprep.subr.mxu0 0.0
    %1884 = vmatpush1.msra.mxu0 0.0
    %1885 = vmatprep.subr.mxu0 0.0
    %1886 = vmatpush1.msra.mxu0 0.0
    %1887 = vmatprep.subr.mxu0 0.0
    %1888 = vmatpush1.msra.mxu0 0.0
    %1889 = vmatprep.subr.mxu0 0.0
    %1890 = vmatpush1.msra.mxu0 0.0
    %1891 = vmatprep.subr.mxu0 0.0
    %1892 = vmatpush1.msra.mxu0 %v1854
    %1893 = vmatprep.subr.mxu0 0.0
    %1894 = vmatpush1.msra.mxu0 %v1853
    %1895 = vmatprep.subr.mxu0 0.0
    %1896 = vmatpush1.msra.mxu0 %v1852
    %1897 = vmatprep.subr.mxu0 0.0
    %1898 = vmatpush1.msra.mxu0 %v1851
    %1899 = vmatprep.subr.mxu0 0.0
    %1900 = vmatpush2.msra.mxu0 0.0
    %1901 = vmatprep.subr.mxu0 0.0
    %1902 = vmatpush2.msra.mxu0 0.0
    %1903 = vmatprep.subr.mxu0 0.0
    %1904 = vmatpush2.msra.mxu0 0.0
    %1905 = vmatprep.subr.mxu0 0.0
    %1906 = vmatpush2.msra.mxu0 0.0
    %1907 = vmatprep.subr.mxu0 0.0
    %1908 = vmatpush2.msra.mxu0 0.0
    %1909 = vmatprep.subr.mxu0 0.0
    %1910 = vmatpush2.msra.mxu0 0.0
    %1911 = vmatprep.subr.mxu0 0.0
    %1912 = vmatpush2.msra.mxu0 0.0
    %1913 = vmatprep.subr.mxu0 0.0
    %1914 = vmatpush2.msra.mxu0 0.0
    %1915 = vmatprep.subr.mxu0 0.0
    %1916 = vmatpush2.msra.mxu0 0.0
    %1917 = vmatprep.subr.mxu0 0.0
    %1918 = vmatpush2.msra.mxu0 0.0
    %1919 = vmatprep.subr.mxu0 0.0
    %1920 = vmatpush2.msra.mxu0 0.0
    %1921 = vmatprep.subr.mxu0 0.0
    %1922 = vmatpush2.msra.mxu0 0.0
    %1923 = vmatprep.subr.mxu0 0.0
    %1924 = vmatpush2.msra.mxu0 0.0
    %1925 = vmatprep.subr.mxu0 0.0
    %1926 = vmatpush2.msra.mxu0 0.0
    %1927 = vmatprep.subr.mxu0 0.0
    %1928 = vmatpush2.msra.mxu0 0.0
    %1929 = vmatprep.subr.mxu0 0.0
    %1930 = vmatpush2.msra.mxu0 0.0
    %1931 = vmatprep.mubr.f32.mxu0 0.0
    %1932 = vmatmul.mubr.f32.gmra.mxu0 %v1865
    %v1933 = vpop.f32.mrf.mxu0
    %v1934 = vadd.f32 %v1860, %v1933
    %v1935 = vpop.f32.mrf.mxu0
    %1936 = vdwg.mxu0
    %1937 = vst [vmem:[#allocation7] sm:$0xff] %v1934
    %1938 = vst.msk [vmem:[#allocation8] sm:$0xff] %vm222, %v1747
    %s1940 = scalar_lea.vmem [#allocation8], 8
    %1941 = vst.msk [vmem:[%s1940] sm:$0xff] %vm222, %v1864
    %1943 = vrot.lane.b32.xlu0 %v1738, 96
    %v1944 = vpop.permute.xlu0 %1943
    %1946 = vst.msk [vmem:[#allocation10] sm:$0xff] %vm222, %v1944
    %1948 = vrot.lane.b32.xlu0 %v1844, 96
    %v1949 = vpop.permute.xlu0 %1948
    %s1951 = scalar_lea.vmem [#allocation10], 8
    %1952 = vst.msk [vmem:[%s1951] sm:$0xff] %vm222, %v1949
    // Predicated region
    $region42: #{tpu_custom_call.1} parent=1 // pred_check
      _
    $region43: #{tpu_custom_call.1} parent=1 // pred_check_branch
      %1954 = sbr.rel (0) target = $region45
    $region44: #{tpu_custom_call.1} parent=1 // pred_region
      %s1956 = ssub.s32 128, 128
      %1957 = vsyncadd [#allocation4], %s1956
      %s1959 = sshll.u32 [#allocation7], 4
      %s1960 = int_to_ptr.vmem [resolvable:$true] %s1959
      %1962 = dma.vmem_to_hbm [thread:$0]  %s1960, 128, %s8, [#allocation4]
    $region45: #{tpu_custom_call.1} parent=1 // pred_fallthru
      _
    // Predicated region
    $region46: #{tpu_custom_call.1} parent=1 // pred_check
      _
    $region47: #{tpu_custom_call.1} parent=1 // pred_check_branch
      %1964 = sbr.rel (0) target = $region49
    $region48: #{tpu_custom_call.1} parent=1 // pred_region
      %s1966 = ssub.s32 256, 256
      %1967 = vsyncadd [#allocation9], %s1966
      %s1968 = sshll.u32 [#allocation8], 4
      %s1969 = int_to_ptr.vmem [resolvable:$true] %s1968
      %1974 = dma.vmem_to_hbm [thread:$0]  %s1969, 256, %s9, [#allocation9], 128, 128, 8
    $region49: #{tpu_custom_call.1} parent=1 // pred_fallthru
      _
    // Predicated region
    $region50: #{tpu_custom_call.1} parent=1 // pred_check
      _
    $region51: #{tpu_custom_call.1} parent=1 // pred_check_branch
      %1976 = sbr.rel (0) target = $region53
    $region52: #{tpu_custom_call.1} parent=1 // pred_region
      %s1978 = ssub.s32 256, 256
      %1979 = vsyncadd [#allocation9], %s1978
      %s1980 = sshll.u32 [#allocation10], 4
      %s1981 = int_to_ptr.vmem [resolvable:$true] %s1980
      %1986 = dma.vmem_to_hbm [thread:$0]  %s1981, 256, %s10, [#allocation9], 128, 128, 8
    $region53: #{tpu_custom_call.1} parent=1 // pred_fallthru
      _
    // Predicated region
    $region54: #{tpu_custom_call.1} parent=1 // pred_check
      _
    $region55: #{tpu_custom_call.1} parent=1 // pred_check_branch
      %1988 = sbr.rel (0) target = $region57
    $region56: #{tpu_custom_call.1} parent=1 // pred_region
      %1989 = dma.done [#allocation4], 128
    $region57: #{tpu_custom_call.1} parent=1 // pred_fallthru
      _
    // Predicated region
    $region58: #{tpu_custom_call.1} parent=1 // pred_check
      _
    $region59: #{tpu_custom_call.1} parent=1 // pred_check_branch
      %1991 = sbr.rel (0) target = $region61
    $region60: #{tpu_custom_call.1} parent=1 // pred_region
      %1992 = dma.done [#allocation9], 256
    $region61: #{tpu_custom_call.1} parent=1 // pred_fallthru
      _
    // Predicated region
    $region62: #{tpu_custom_call.1} parent=1 // pred_check
      _
    $region63: #{tpu_custom_call.1} parent=1 // pred_check_branch
      %1994 = sbr.rel (0) target = $region65
    $region64: #{tpu_custom_call.1} parent=1 // pred_region
      %1995 = dma.done [#allocation9], 256
    $region65: #{tpu_custom_call.1} parent=1 // pred_fallthru
      _
    %1996 = vsyncpa [#allocation3], 1
    %1997 = vsyncpa [#allocation6], 1
    %1998 = vsyncpa [#allocation4], 1
    %1999 = vsyncpa [#allocation9], 1

</llo_original>
